<compile_context>
chip_gen: v7x
topology: tpu7x:2x2x1
jax: 0.10.0
libtpu: 0.0.40
codegen_flags: <defaults>
</compile_context>

<pallas_src>
import math

import jax
import jax.numpy as jnp
from jax.experimental import pallas as pl
from jax.experimental.pallas import tpu as pltpu


def _choose_row_tile(H_out, W_out):
    """Largest divisor TH of H_out with TH*W_out <= ~512 rows (sublane-friendly)."""
    target_rows = 512
    best = H_out
    for th in range(1, H_out + 1):
        if H_out % th:
            continue
        rows = th * W_out
        if th != H_out and rows % 8:       # out-block sublane constraint when tiled
            continue
        if rows <= target_rows:
            best = th
    return best


def _make_kernel(TH, W_out, KH, KW, stride, Kdim):
    rows_needed = (TH - 1) * stride + KH

    def kernel(w_ref, ind_ref, x_ref, o_ref):
        # w_ref:   (Kdim, Cout_pad)          bf16, pre-packed (kh, kw, cin)-major
        # ind_ref: (1, Cout_pad)             f32 channel indicator
        # x_ref:   (1, Hp, Wp, Cin)          one padded batch element (NHWC)
        # o_ref:   (1, TH*W_out, Cout_pad)   lane-dense output tile
        t = pl.program_id(1)
        row0 = pl.multiple_of(t * (TH * stride), TH * stride)
        xa = x_ref[0, pl.ds(row0, rows_needed), :, :]      # (rows_needed, Wp, Cin)

        # im2col: fold all KH*KW taps (and Cin) onto the contraction axis.
        # TODO(synk): for stride > 1, pre-split x into stride phases in the
        # wrapper so these slices stay unit-stride (avoids XLU gathers).
        cols = []
        for kh in range(KH):
            for kw in range(KW):
                cols.append(xa[kh:kh + (TH - 1) * stride + 1:stride,
                               kw:kw + (W_out - 1) * stride + 1:stride, :])
        slab = jnp.concatenate(cols, axis=-1)              # (TH, W_out, Kdim)
        slab = slab.reshape(TH * W_out, Kdim).astype(jnp.bfloat16)

        acc = jnp.dot(slab, w_ref[...],                    # one MXU contraction
                      preferred_element_type=jnp.float32)  # (TH*W_out, Cout_pad) f32
        o_ref[0] = (acc * ind_ref[...]).astype(o_ref.dtype)

    return kernel


def singlepath_channel_conv2d(x_nchw, weight_oihw, channel_alpha,
                              *, stride=1, padding=0, groups=1):
    N, Cin, H, W = x_nchw.shape
    Cout, cin_g, KH, KW = weight_oihw.shape
    assert Cin % groups == 0 and Cout % groups == 0 and cin_g == Cin // groups
    cout_g = Cout // groups

    Hp, Wp = H + 2 * padding, W + 2 * padding
    H_out = (Hp - KH) // stride + 1
    W_out = (Wp - KW) // stride + 1
    Kdim = KH * KW * Cin
    Cout_pad = ((Cout + 127) // 128) * 128

    wf32 = weight_oihw.astype(jnp.float32)

    # --- channel indicator: computed once, outside the (sequential) grid ---
    norm = jnp.sqrt(jnp.sum(wf32 * wf32, axis=(1, 2, 3)))                  # (Cout,)
    ind = jax.nn.sigmoid(norm[None, :] - channel_alpha.astype(jnp.float32))
    # (PyTorch's cumprod loop over indicators is empty for shape (1, Cout).)
    ind = jnp.pad(ind, ((0, 0), (0, Cout_pad - Cout)))                     # (1, Cout_pad)

    # --- weight pre-packed to 2-D, block-diagonal over groups, bf16 --------
    w_hwio = jnp.transpose(wf32, (2, 3, 1, 0))                             # (KH,KW,cin_g,Cout)
    if groups == 1:
        w_full = w_hwio
    else:
        w_full = jnp.zeros((KH, KW, Cin, Cout), jnp.float32)
        for g in range(groups):
            w_full = w_full.at[:, :, g * cin_g:(g + 1) * cin_g,
                               g * cout_g:(g + 1) * cout_g].set(
                w_hwio[:, :, :, g * cout_g:(g + 1) * cout_g])
    w2d = w_full.reshape(Kdim, Cout)
    w2d = jnp.pad(w2d, ((0, 0), (0, Cout_pad - Cout))).astype(jnp.bfloat16)

    # --- activations: NCHW -> NHWC, spatial zero pad ------------------------
    x = jnp.transpose(x_nchw, (0, 2, 3, 1))
    x = jnp.pad(x, ((0, 0), (padding, padding), (padding, padding), (0, 0)))

    TH = _choose_row_tile(H_out, W_out)
    n_ht = H_out // TH

    kernel = _make_kernel(TH, W_out, KH, KW, stride, Kdim)

    out = pl.pallas_call(
        kernel,
        out_shape=jax.ShapeDtypeStruct((N, H_out * W_out, Cout_pad), x_nchw.dtype),
        grid_spec=pltpu.PrefetchScalarGridSpec(
            num_scalar_prefetch=0,
            grid=(N, n_ht),
            in_specs=[
                pl.BlockSpec((Kdim, Cout_pad), lambda n, t: (0, 0)),
                pl.BlockSpec((1, Cout_pad), lambda n, t: (0, 0)),
                # One padded image per batch element (block index constant over t,
                # so it stays resident across the row-tile axis). Fine at these
                # sizes; very large images would need halo'd row blocks of x too.
                pl.BlockSpec((1, Hp, Wp, Cin), lambda n, t: (n, 0, 0, 0)),
            ],
            out_specs=pl.BlockSpec((1, TH * W_out, Cout_pad),
                                   lambda n, t: (n, t, 0)),
        ),
        compiler_params=pltpu.CompilerParams(
            dimension_semantics=("parallel", "parallel"),
            vmem_limit_bytes=64 * 1024 * 1024),
    )(w2d, ind, x)

    out = out[:, :, :Cout].reshape(N, H_out, W_out, Cout)
    return jnp.transpose(out, (0, 3, 1, 2))                                # NCHW


if __name__ == "__main__":
    # Small shapes consistent with the module.
    N, Cin, H, W = 2, 4, 16, 16
    Cout, k = 8, 3
    stride, padding, groups = 1, 1, 1
    cin_g = Cin // groups

    key = jax.random.PRNGKey(0)
    kw_, ka_, kx_ = jax.random.split(key, 3)

    # Deterministic init mirroring reset_parameters():
    # kaiming_uniform_(a=sqrt(5)) -> U(-1/sqrt(fan_in), 1/sqrt(fan_in)).
    fan_in = cin_g * k * k
    bound = 1.0 / math.sqrt(fan_in)
    weight = jax.random.uniform(kw_, (Cout, cin_g, k, k), jnp.float32,
                                minval=-bound, maxval=bound)
    channel_alpha = jax.random.uniform(ka_, (1, Cout), jnp.float32,
                                       minval=-1.0, maxval=1.0)
    x = jax.random.normal(kx_, (N, Cin, H, W), jnp.float32)

    out = singlepath_channel_conv2d(x, weight, channel_alpha,
                                    stride=stride, padding=padding,
                                    groups=groups)
    out = jax.block_until_ready(out)

    # Pure-JAX reference using the same precision regime as the kernel
    # (bf16 operands, f32 accumulation; indicator in f32).
    ref_conv = jax.lax.conv_general_dilated(
        x.astype(jnp.bfloat16), weight.astype(jnp.bfloat16),
        window_strides=(stride, stride),
        padding=((padding, padding), (padding, padding)),
        dimension_numbers=("NCHW", "OIHW", "NCHW"),
        feature_group_count=groups,
        preferred_element_type=jnp.float32)
    norm = jnp.sqrt(jnp.sum(weight * weight, axis=(1, 2, 3)))   # (Cout,)
    ind = jax.nn.sigmoid(norm[None, :] - channel_alpha)         # (1, Cout)
    ref = ref_conv * ind[:, :, None, None]

    H_out = (H + 2 * padding - k) // stride + 1
    W_out = (W + 2 * padding - k) // stride + 1
    assert out.shape == (N, Cout, H_out, W_out) and out.dtype == jnp.float32
    err = float(jnp.max(jnp.abs(out - ref)))
    assert err < 5e-2, err

    print("KERNEL_OK")
</pallas_src>

<mosaic_0001>
module attributes {stable_mosaic.version = 11 : i64} {
  func.func @kernel(%arg0: i32, %arg1: i32, %arg2: memref<36x128xbf16, #tpu.memory_space<vmem>>, %arg3: memref<1x128xf32, #tpu.memory_space<vmem>>, %arg4: memref<1x18x18x4xf32, #tpu.memory_space<vmem>>, %arg5: memref<1x256x128xf32, #tpu.memory_space<vmem>>) attributes {dimension_semantics = [#tpu.dimension_semantics<parallel>, #tpu.dimension_semantics<parallel>], iteration_bounds = array<i64: 2, 1>, scalar_prefetch = 0 : i64, scratch_operands = 0 : i64, tpu.core_type = #tpu.core_type<tc>, window_params = [{pipeline_mode = #tpu.pipeline_mode<synchronous>, transform_indices = @transform_0, window_bounds = array<i64: 36, 128>}, {pipeline_mode = #tpu.pipeline_mode<synchronous>, transform_indices = @transform_1, window_bounds = array<i64: 1, 128>}, {transform_indices = @transform_2, window_bounds = array<i64: 1, 18, 18, 4>}, {transform_indices = @transform_3, window_bounds = array<i64: 1, 256, 128>}]} {
    %c16_i32 = arith.constant 16 : i32
    %0 = arith.muli %arg1, %c16_i32 : i32
    %1 = tpu.assume_multiple %0, 16 : i32
    %c0 = arith.constant 0 : index
    %2 = arith.index_cast %1 : i32 to index
    %c0_0 = arith.constant 0 : index
    %c0_1 = arith.constant 0 : index
    %3 = vector.load %arg4[%c0, %2, %c0_0, %c0_1] : memref<1x18x18x4xf32, #tpu.memory_space<vmem>>, vector<1x18x18x4xf32>
    %4 = vector.shape_cast %3 : vector<1x18x18x4xf32> to vector<18x18x4xf32>
    %5 = vector.extract_strided_slice %4 {offsets = [0, 0, 0], sizes = [16, 16, 4], strides = [1, 1, 1]} : vector<18x18x4xf32> to vector<16x16x4xf32>
    %6 = vector.extract_strided_slice %4 {offsets = [0, 1, 0], sizes = [16, 16, 4], strides = [1, 1, 1]} : vector<18x18x4xf32> to vector<16x16x4xf32>
    %7 = vector.extract_strided_slice %4 {offsets = [0, 2, 0], sizes = [16, 16, 4], strides = [1, 1, 1]} : vector<18x18x4xf32> to vector<16x16x4xf32>
    %8 = vector.extract_strided_slice %4 {offsets = [1, 0, 0], sizes = [16, 16, 4], strides = [1, 1, 1]} : vector<18x18x4xf32> to vector<16x16x4xf32>
    %9 = vector.extract_strided_slice %4 {offsets = [1, 1, 0], sizes = [16, 16, 4], strides = [1, 1, 1]} : vector<18x18x4xf32> to vector<16x16x4xf32>
    %10 = vector.extract_strided_slice %4 {offsets = [1, 2, 0], sizes = [16, 16, 4], strides = [1, 1, 1]} : vector<18x18x4xf32> to vector<16x16x4xf32>
    %11 = vector.extract_strided_slice %4 {offsets = [2, 0, 0], sizes = [16, 16, 4], strides = [1, 1, 1]} : vector<18x18x4xf32> to vector<16x16x4xf32>
    %12 = vector.extract_strided_slice %4 {offsets = [2, 1, 0], sizes = [16, 16, 4], strides = [1, 1, 1]} : vector<18x18x4xf32> to vector<16x16x4xf32>
    %13 = vector.extract_strided_slice %4 {offsets = [2, 2, 0], sizes = [16, 16, 4], strides = [1, 1, 1]} : vector<18x18x4xf32> to vector<16x16x4xf32>
    %14 = tpu.concatenate %5, %6, %7, %8, %9, %10, %11, %12, %13 in 2 : vector<16x16x4xf32>, vector<16x16x4xf32>, vector<16x16x4xf32>, vector<16x16x4xf32>, vector<16x16x4xf32>, vector<16x16x4xf32>, vector<16x16x4xf32>, vector<16x16x4xf32>, vector<16x16x4xf32> -> vector<16x16x36xf32>
    %15 = vector.shape_cast %14 : vector<16x16x36xf32> to vector<256x36xf32>
    %16 = arith.truncf %15 : vector<256x36xf32> to vector<256x36xbf16>
    %c0_2 = arith.constant 0 : index
    %c0_3 = arith.constant 0 : index
    %17 = vector.load %arg2[%c0_2, %c0_3] : memref<36x128xbf16, #tpu.memory_space<vmem>>, vector<36x128xbf16>
    %cst = arith.constant dense<0.000000e+00> : vector<256x128xf32>
    %18 = tpu.matmul %16, %17, %cst {dimension_numbers = #tpu.dot_dimension_numbers<[1], [0], [0], [1], [0, 0, 1, 1], [], []>} : vector<256x36xbf16>, vector<36x128xbf16>, vector<256x128xf32> -> vector<256x128xf32>
    %c0_4 = arith.constant 0 : index
    %c0_5 = arith.constant 0 : index
    %19 = vector.load %arg3[%c0_4, %c0_5] : memref<1x128xf32, #tpu.memory_space<vmem>>, vector<1x128xf32>
    %20 = vector.broadcast %19 : vector<1x128xf32> to vector<256x128xf32>
    %21 = arith.mulf %18, %20 : vector<256x128xf32>
    %c0_6 = arith.constant 0 : index
    %c0_7 = arith.constant 0 : index
    %c0_8 = arith.constant 0 : index
    %22 = vector.load %arg5[%c0_6, %c0_7, %c0_8] : memref<1x256x128xf32, #tpu.memory_space<vmem>>, vector<1x256x128xf32>
    %23 = vector.shape_cast %22 : vector<1x256x128xf32> to vector<256x128xf32>
    %24 = vector.shape_cast %21 : vector<256x128xf32> to vector<1x256x128xf32>
    tpu.vector_store %arg5[%c0_6, %c0_7, %c0_8], %24 {strides = array<i32>} : memref<1x256x128xf32, #tpu.memory_space<vmem>>, vector<1x256x128xf32>,
    return
  }
  func.func @transform_0(%arg0: i32, %arg1: i32) -> (i32, i32) {
    %c0_i32 = arith.constant 0 : i32
    %c0_i32_0 = arith.constant 0 : i32
    %c0_i32_1 = arith.constant 0 : i32
    return %c0_i32, %c0_i32_0 : i32, i32
  }
  func.func @transform_1(%arg0: i32, %arg1: i32) -> (i32, i32) {
    %c0_i32 = arith.constant 0 : i32
    %c0_i32_0 = arith.constant 0 : i32
    %c0_i32_1 = arith.constant 0 : i32
    return %c0_i32, %c0_i32_0 : i32, i32
  }
  func.func @transform_2(%arg0: i32, %arg1: i32) -> (i32, i32, i32, i32) {
    %c0_i32 = arith.constant 0 : i32
    %c0_i32_0 = arith.constant 0 : i32
    %c0_i32_1 = arith.constant 0 : i32
    %c0_i32_2 = arith.constant 0 : i32
    return %arg0, %c0_i32, %c0_i32_0, %c0_i32_1 : i32, i32, i32, i32
  }
  func.func @transform_3(%arg0: i32, %arg1: i32) -> (i32, i32, i32) {
    %c0_i32 = arith.constant 0 : i32
    %c0_i32_0 = arith.constant 0 : i32
    return %arg0, %arg1, %c0_i32 : i32, i32, i32
  }
}

</mosaic_0001>

<llo_original>
// kernel: tpu_custom_call.1
$region0: #{tpu_custom_call.1}
  #allocation0 [shape = 'u32[]', space=smem, size = 0x4, offset = 0x4, fixed_abs, tag = 'smem constant byte address 0x4 - core index']
  #allocation1 [shape = 'u32[144,128]{1,0:T(1,128)}', space=vmem, size = 0x12000, scoped, tag = 'internal scratch']
  %s0 = inlined_call_operand.hbm [shape: bf16[36,128], index: 0, kind: input, shape index: {}]
  %s1 = inlined_call_operand.hbm [shape: f32[1,128], index: 1, kind: input, shape index: {}]
  %s2 = inlined_call_operand.hbm [shape: f32[2,18,18,4], index: 2, kind: input, shape index: {}]
  %s3 = inlined_call_operand.hbm [shape: f32[2,256,128], index: 3, kind: output, shape index: {}]
  %s4 = sld [smem:[#allocation0]]
  $region57: #{tpu_custom_call.1} parent=0
    _
  %s6 = ssub.s32 1, %s4
  %s7 = scalar_select 0, %s6, %s4
  $region1: #{tpu_custom_call.1} parent=0
    #allocation2 [shape = 'u8[10240]{0}', space=vmem, size = 0x2800, scoped, tag = 'input window, operand 0, single buffered']
    #allocation3 [shape = 's32[2]{0}', space=sflag, size = 0x8, scoped, tag = 'scoped memory for tpu_custom_call.1']
    #allocation4 [shape = 's32[2]{0}', space=sflag, size = 0x8, scoped, tag = 'scoped memory for tpu_custom_call.1']
    #allocation5 [shape = 'u8[512]{0}', space=vmem, size = 0x400, scoped, tag = 'input window, operand 1, single buffered']
    #allocation6 [shape = 's32[1]{0}', space=sflag, size = 0x4, scoped, tag = 'scoped memory for tpu_custom_call.1']
    #allocation7 [shape = 'u8[442368]{0}', space=vmem, size = 0x6c000, scoped, tag = 'input window, operand 2']
    #allocation8 [shape = 'u8[262144]{0}', space=vmem, size = 0x40000, scoped, tag = 'output window, operand 0']
    %8 = vsyncpa [#allocation3], 0
    %9 = vsyncpa [#allocation6], 0
    %10 = vsyncpa [#allocation4], 0
    %s11 = scalar_lea.sflag [#allocation4], 1
    %12 = vsyncpa %s11, 0
    loop: start=0, step=1, limit=4
    $region2: #{tpu_custom_call.1} parent=1 // loop_pre_header
      _
    $region3: #{tpu_custom_call.1} parent=1 // loop_header
      %s14 = sphi 0, %s18
      %p15 = scmp.ge.s32.totalorder %s14, 4
      %s21 = sphi 0, %s33
      %s22 = sphi 0, %s29
      %s23 = sphi 0, %s21
      %s24 = sphi 0, %s22
      %s25 = sphi 0, %s23
      %s26 = sphi 0, %s24
      %s34 = sphi 0, %s34
      %s36 = sphi 0, %s34
      %s37 = sphi 0, %s36
      %s51 = sphi 0, %s37
      %s55 = sphi 0, %s55
      %s57 = sphi 0, %s55
      %s58 = sphi 0, %s57
      %s72 = sphi 0, %s58
      %s78 = sphi 0, %s80
      %s81 = sphi 0, %s78
      %s82 = sphi 0, %s81
      %s98 = sphi 0, %s82
      %s106 = sphi 0, %s108
      %s109 = sphi 0, %s106
      %s110 = sphi 0, %s109
      %s126 = sphi 0, %s110
    $region4: #{tpu_custom_call.1} parent=1 // loop_header_branch
      %17 = sbr.rel (%p15) target = $region8
    $region5: #{tpu_custom_call.1} parent=1 // loop_body
      %s19 = ssub.s32 %s14, 1
      %s20 = ssub.s32 %s14, 2
      %s27 = sadd.s32 1, %s22
      %p28 = scmp.ge.s32.totalorder %s27, 1
      %s29 = scalar_select %p28, 0, %s27
      %s30 = sadd.s32 1, %s21
      %s31 = scalar_select %p28, %s30, %s21
      %p32 = scmp.ge.s32.totalorder %s31, 2
      %s33 = scalar_select %p32, 0, %s31
      %s35 = sadd.s32 %s34, 1
      %p38 = scmp.eq.s32.totalorder %s14, 1
      %p39 = scmp.ne.s32.totalorder %s34, %s36
      %p40 = scmp.eq.s32.totalorder %s14, 0
      %p41 = por %p39, %p40
      %p42 = scmp.ne.s32.totalorder %s34, %s36
      %p43 = scmp.eq.s32.totalorder %s19, 1
      %p44 = por %p42, %p43
      %p45 = scmp.ne.s32.totalorder %s36, %s37
      %p46 = scmp.eq.s32.totalorder %s19, 0
      %p47 = por %p45, %p46
      %p48 = scmp.ne.s32.totalorder %s36, %s37
      %p49 = scmp.eq.s32.totalorder %s20, 1
      %p50 = por %p48, %p49
      %p52 = scmp.ne.s32.totalorder %s37, %s51
      %p53 = scmp.eq.s32.totalorder %s20, 0
      %p54 = por %p52, %p53
      %s56 = sadd.s32 %s55, 1
      %p59 = scmp.eq.s32.totalorder %s14, 1
      %p60 = scmp.ne.s32.totalorder %s55, %s57
      %p61 = scmp.eq.s32.totalorder %s14, 0
      %p62 = por %p60, %p61
      %p63 = scmp.ne.s32.totalorder %s55, %s57
      %p64 = scmp.eq.s32.totalorder %s19, 1
      %p65 = por %p63, %p64
      %p66 = scmp.ne.s32.totalorder %s57, %s58
      %p67 = scmp.eq.s32.totalorder %s19, 0
      %p68 = por %p66, %p67
      %p69 = scmp.ne.s32.totalorder %s57, %s58
      %p70 = scmp.eq.s32.totalorder %s20, 1
      %p71 = por %p69, %p70
      %p73 = scmp.ne.s32.totalorder %s58, %s72
      %p74 = scmp.eq.s32.totalorder %s20, 0
      %p75 = por %p73, %p74
      %s76 = ssub.s32 %s21, %s33
      %p77 = scmp.eq.s32.totalorder %s76, 0
      %s79 = sadd.s32 %s78, 1
      %s80 = scalar_select %p77, %s78, %s79
      %p83 = pneg %p77
      %p84 = scmp.eq.s32.totalorder %s14, 1
      %p85 = por %p83, %p84
      %p86 = scmp.ne.s32.totalorder %s78, %s81
      %p87 = scmp.eq.s32.totalorder %s14, 0
      %p88 = por %p86, %p87
      %p89 = scmp.ne.s32.totalorder %s78, %s81
      %p90 = scmp.eq.s32.totalorder %s19, 1
      %p91 = por %p89, %p90
      %p92 = scmp.ne.s32.totalorder %s81, %s82
      %p93 = scmp.eq.s32.totalorder %s19, 0
      %p94 = por %p92, %p93
      %p95 = scmp.ne.s32.totalorder %s81, %s82
      %p96 = scmp.eq.s32.totalorder %s20, 1
      %p97 = por %p95, %p96
      %p99 = scmp.ne.s32.totalorder %s82, %s98
      %p100 = scmp.eq.s32.totalorder %s20, 0
      %p101 = por %p99, %p100
      %s102 = ssub.s32 %s21, %s33
      %s103 = ssub.s32 %s22, %s29
      %s104 = sor.u32 %s102, %s103
      %p105 = scmp.eq.s32.totalorder %s104, 0
      %s107 = sadd.s32 %s106, 1
      %s108 = scalar_select %p105, %s106, %s107
      %p111 = pneg %p105
      %p112 = scmp.eq.s32.totalorder %s14, 1
      %p113 = por %p111, %p112
      %p114 = scmp.ne.s32.totalorder %s106, %s109
      %p115 = scmp.eq.s32.totalorder %s14, 0
      %p116 = por %p114, %p115
      %p117 = scmp.ne.s32.totalorder %s106, %s109
      %p118 = scmp.eq.s32.totalorder %s19, 1
      %p119 = por %p117, %p118
      %p120 = scmp.ne.s32.totalorder %s109, %s110
      %p121 = scmp.eq.s32.totalorder %s19, 0
      %p122 = por %p120, %p121
      %p123 = scmp.ne.s32.totalorder %s109, %s110
      %p124 = scmp.eq.s32.totalorder %s20, 1
      %p125 = por %p123, %p124
      %p127 = scmp.ne.s32.totalorder %s110, %s126
      %p128 = scmp.eq.s32.totalorder %s20, 0
      %p129 = por %p127, %p128
      %p130 = scmp.le.s32.totalorder 1, %s14
      %p131 = scmp.lt.s32.totalorder %s14, 3
      %p132 = pnand %p130, %p131
      %p133 = pneg %p132
      // Predicated region
      $region9: #{tpu_custom_call.1} parent=5 // pred_check
        _
      $region10: #{tpu_custom_call.1} parent=5 // pred_check_branch
        %135 = sbr.rel (%p132) target = $region12
      $region11: #{tpu_custom_call.1} parent=5 // pred_region
        %s136 = ssub.s32 %s14, 1
        // Predicated region
        $region13: #{tpu_custom_call.1} parent=11 // pred_check
          %p137 = pneg %p47
        $region14: #{tpu_custom_call.1} parent=11 // pred_check_branch
          %139 = sbr.rel (%p137) target = $region16
        $region15: #{tpu_custom_call.1} parent=11 // pred_region
          %s141 = ssub.s32 320, 320
          %142 = vsyncadd [#allocation3], %s141
          %s143 = sshll.u32 [#allocation2], 4
          %s144 = int_to_ptr.vmem [resolvable:$true] %s143
          %149 = dma.hbm_to_vmem [thread:$0]  %s0, 320, %s144, [#allocation3], 64, 64, 4
        $region16: #{tpu_custom_call.1} parent=11 // pred_fallthru
          _
        // Predicated region
        $region17: #{tpu_custom_call.1} parent=11 // pred_check
          %p150 = pneg %p68
        $region18: #{tpu_custom_call.1} parent=11 // pred_check_branch
          %152 = sbr.rel (%p150) target = $region20
        $region19: #{tpu_custom_call.1} parent=11 // pred_region
          %s154 = ssub.s32 16, 16
          %155 = vsyncadd [#allocation6], %s154
          %s157 = sshll.u32 [#allocation5], 4
          %s158 = int_to_ptr.vmem [resolvable:$true] %s157
          %160 = dma.hbm_to_vmem [thread:$0]  %s1, 16, %s158, [#allocation6]
        $region20: #{tpu_custom_call.1} parent=11 // pred_fallthru
          _
      $region12: #{tpu_custom_call.1} parent=5 // pred_fallthru
        _
      %p161 = scmp.lt.s32.totalorder %s14, 2
      // Predicated region
      $region21: #{tpu_custom_call.1} parent=5 // pred_check
        %p162 = pneg %p161
      $region22: #{tpu_custom_call.1} parent=5 // pred_check_branch
        %164 = sbr.rel (%p162) target = $region24
      $region23: #{tpu_custom_call.1} parent=5 // pred_region
        // Predicated region
        $region25: #{tpu_custom_call.1} parent=23 // pred_check
          %p165 = pneg %p88
        $region26: #{tpu_custom_call.1} parent=23 // pred_check_branch
          %167 = sbr.rel (%p165) target = $region28
        $region27: #{tpu_custom_call.1} parent=23 // pred_region
          %s168 = sand.u32 %s14, 1
          %s169 = scalar_lea.sflag [#allocation3], %s168
          %s170 = sand.u32 %s78, 1
          %s171 = smul.addr %s170, 432
          %s172 = scalar_lea.vmem [#allocation7], %s171
          %s174 = ssub.s32 6912, 6912
          %175 = vsyncadd %s169, %s174
          %s176 = smul.addr %s21, 54
          %s177 = smul.addr %s176, 128
          %s178 = scalar_lea.hbm %s2, %s177
          %s179 = sshll.u32 %s172, 4
          %s180 = int_to_ptr.vmem [resolvable:$true] %s179
          %185 = dma.hbm_to_vmem [thread:$0]  %s178, 6912, %s180, %s169, 128, 128, 8
        $region28: #{tpu_custom_call.1} parent=23 // pred_fallthru
          _
      $region24: #{tpu_custom_call.1} parent=5 // pred_fallthru
        _
      %p186 = scmp.le.s32.totalorder 1, %s14
      %p187 = scmp.lt.s32.totalorder %s14, 3
      %p188 = pnand %p186, %p187
      %p189 = pneg %p188
      // Predicated region
      $region29: #{tpu_custom_call.1} parent=5 // pred_check
        _
      $region30: #{tpu_custom_call.1} parent=5 // pred_check_branch
        %191 = sbr.rel (%p188) target = $region32
      $region31: #{tpu_custom_call.1} parent=5 // pred_region
        %s192 = ssub.s32 %s14, 1
        // Predicated region
        $region33: #{tpu_custom_call.1} parent=31 // pred_check
          %p193 = pneg %p47
        $region34: #{tpu_custom_call.1} parent=31 // pred_check_branch
          %195 = sbr.rel (%p193) target = $region36
        $region35: #{tpu_custom_call.1} parent=31 // pred_region
          %196 = dma.done [#allocation3], 320
        $region36: #{tpu_custom_call.1} parent=31 // pred_fallthru
          _
        // Predicated region
        $region37: #{tpu_custom_call.1} parent=31 // pred_check
          %p197 = pneg %p68
        $region38: #{tpu_custom_call.1} parent=31 // pred_check_branch
          %199 = sbr.rel (%p197) target = $region40
        $region39: #{tpu_custom_call.1} parent=31 // pred_region
          %200 = dma.done [#allocation6], 16
        $region40: #{tpu_custom_call.1} parent=31 // pred_fallthru
          _
        %s201 = sand.u32 %s19, 1
        %s202 = scalar_lea.sflag [#allocation3], %s201
        %s203 = sand.u32 %s81, 1
        %s204 = smul.addr %s203, 432
        %s205 = scalar_lea.vmem [#allocation7], %s204
        // Predicated region
        $region41: #{tpu_custom_call.1} parent=31 // pred_check
          %p206 = pneg %p94
        $region42: #{tpu_custom_call.1} parent=31 // pred_check_branch
          %208 = sbr.rel (%p206) target = $region44
        $region43: #{tpu_custom_call.1} parent=31 // pred_region
          %209 = dma.done %s202, 6912
        $region44: #{tpu_custom_call.1} parent=31 // pred_fallthru
          _
        %p210 = pneg %p47
        %p211 = pneg %p44
        %p212 = pneg %p68
        %p213 = pneg %p65
        %s214 = sand.u32 %s19, 1
        %s215 = scalar_lea.sflag [#allocation3], %s214
        %s216 = sand.u32 %s81, 1
        %s217 = smul.addr %s216, 432
        %s218 = scalar_lea.vmem [#allocation7], %s217
        %p219 = pneg %p94
        %p220 = pneg %p91
        %p221 = pneg %p122
        %p222 = pneg %p119
        %s223 = sand.u32 %s109, 1
        %s224 = scalar_lea.sflag [#allocation4], %s223
        %s225 = sand.u32 %s109, 1
        %s226 = smul.addr %s225, 256
        %s227 = scalar_lea.vmem [#allocation8], %s226
        %s228 = smul.u32 32, %s24
        %s230 = smul.u32 %s24, 16
        %s231 = smul.u32 %s230, 24
        %s232 = scalar_lea.vmem %s205, %s231 [#allocation7]
        %v233 = vld [vmem:[%s232] sm:$0xff]
        %v234 = vld [vmem:[%s232 + $0x8] sm:$0xff]
        %v235 = vld [vmem:[%s232 + $0x10] sm:$0x3]
        %v236 = vld [vmem:[%s232 + $0x18] sm:$0xff]
        %v237 = vld [vmem:[%s232 + $0x20] sm:$0xff]
        %v238 = vld [vmem:[%s232 + $0x28] sm:$0x3]
        %v239 = vld [vmem:[%s232 + $0x30] sm:$0xff]
        %v240 = vld [vmem:[%s232 + $0x38] sm:$0xff]
        %v241 = vld [vmem:[%s232 + $0x40] sm:$0x3]
        %v242 = vld [vmem:[%s232 + $0x48] sm:$0xff]
        %v243 = vld [vmem:[%s232 + $0x50] sm:$0xff]
        %v244 = vld [vmem:[%s232 + $0x58] sm:$0x3]
        %v245 = vld [vmem:[%s232 + $0x60] sm:$0xff]
        %v246 = vld [vmem:[%s232 + $0x68] sm:$0xff]
        %v247 = vld [vmem:[%s232 + $0x70] sm:$0x3]
        %v248 = vld [vmem:[%s232 + $0x78] sm:$0xff]
        %v249 = vld [vmem:[%s232 + $0x80] sm:$0xff]
        %v250 = vld [vmem:[%s232 + $0x88] sm:$0x3]
        %v251 = vld [vmem:[%s232 + $0x90] sm:$0xff]
        %v252 = vld [vmem:[%s232 + $0x98] sm:$0xff]
        %v253 = vld [vmem:[%s232 + $0xa0] sm:$0x3]
        %v254 = vld [vmem:[%s232 + $0xa8] sm:$0xff]
        %v255 = vld [vmem:[%s232 + $0xb0] sm:$0xff]
        %v256 = vld [vmem:[%s232 + $0xb8] sm:$0x3]
        %v257 = vld [vmem:[%s232 + $0xc0] sm:$0xff]
        %v258 = vld [vmem:[%s232 + $0xc8] sm:$0xff]
        %v259 = vld [vmem:[%s232 + $0xd0] sm:$0x3]
        %v260 = vld [vmem:[%s232 + $0xd8] sm:$0xff]
        %v261 = vld [vmem:[%s232 + $0xe0] sm:$0xff]
        %v262 = vld [vmem:[%s232 + $0xe8] sm:$0x3]
        %v263 = vld [vmem:[%s232 + $0xf0] sm:$0xff]
        %v264 = vld [vmem:[%s232 + $0xf8] sm:$0xff]
        %v265 = vld [vmem:[%s232 + $0x100] sm:$0x3]
        %v266 = vld [vmem:[%s232 + $0x108] sm:$0xff]
        %v267 = vld [vmem:[%s232 + $0x110] sm:$0xff]
        %v268 = vld [vmem:[%s232 + $0x118] sm:$0x3]
        %v269 = vld [vmem:[%s232 + $0x120] sm:$0xff]
        %v270 = vld [vmem:[%s232 + $0x128] sm:$0xff]
        %v271 = vld [vmem:[%s232 + $0x130] sm:$0x3]
        %v272 = vld [vmem:[%s232 + $0x138] sm:$0xff]
        %v273 = vld [vmem:[%s232 + $0x140] sm:$0xff]
        %v274 = vld [vmem:[%s232 + $0x148] sm:$0x3]
        %v275 = vld [vmem:[%s232 + $0x150] sm:$0xff]
        %v276 = vld [vmem:[%s232 + $0x158] sm:$0xff]
        %v277 = vld [vmem:[%s232 + $0x160] sm:$0x3]
        %v278 = vld [vmem:[%s232 + $0x168] sm:$0xff]
        %v279 = vld [vmem:[%s232 + $0x170] sm:$0xff]
        %v280 = vld [vmem:[%s232 + $0x178] sm:$0x3]
        %v281 = vld [vmem:[%s232 + $0x180] sm:$0xff]
        %v282 = vld [vmem:[%s232 + $0x188] sm:$0xff]
        %v283 = vld [vmem:[%s232 + $0x190] sm:$0x3]
        %v284 = vld [vmem:[%s232 + $0x198] sm:$0xff]
        %v285 = vld [vmem:[%s232 + $0x1a0] sm:$0xff]
        %v286 = vld [vmem:[%s232 + $0x1a8] sm:$0x3]
        %vm335 = vcmask 1046528
        %v336 = vrot.slane %v233, 1
        %v337 = vrot.slane %v234, 1
        %v338 = vsel %vm335, %v336, %v337
        %v339 = vrot.slane %v235, 1
        %v340 = vsel %vm335, %v337, %v339
        %v341 = vrot.slane %v236, 1
        %v342 = vrot.slane %v237, 1
        %v343 = vsel %vm335, %v341, %v342
        %v344 = vrot.slane %v238, 1
        %v345 = vsel %vm335, %v342, %v344
        %v346 = vrot.slane %v239, 1
        %v347 = vrot.slane %v240, 1
        %v348 = vsel %vm335, %v346, %v347
        %v349 = vrot.slane %v241, 1
        %v350 = vsel %vm335, %v347, %v349
        %v351 = vrot.slane %v242, 1
        %v352 = vrot.slane %v243, 1
        %v353 = vsel %vm335, %v351, %v352
        %v354 = vrot.slane %v244, 1
        %v355 = vsel %vm335, %v352, %v354
        %v356 = vrot.slane %v245, 1
        %v357 = vrot.slane %v246, 1
        %v358 = vsel %vm335, %v356, %v357
        %v359 = vrot.slane %v247, 1
        %v360 = vsel %vm335, %v357, %v359
        %v361 = vrot.slane %v248, 1
        %v362 = vrot.slane %v249, 1
        %v363 = vsel %vm335, %v361, %v362
        %v364 = vrot.slane %v250, 1
        %v365 = vsel %vm335, %v362, %v364
        %v366 = vrot.slane %v251, 1
        %v367 = vrot.slane %v252, 1
        %v368 = vsel %vm335, %v366, %v367
        %v369 = vrot.slane %v253, 1
        %v370 = vsel %vm335, %v367, %v369
        %v371 = vrot.slane %v254, 1
        %v372 = vrot.slane %v255, 1
        %v373 = vsel %vm335, %v371, %v372
        %v374 = vrot.slane %v256, 1
        %v375 = vsel %vm335, %v372, %v374
        %v376 = vrot.slane %v257, 1
        %v377 = vrot.slane %v258, 1
        %v378 = vsel %vm335, %v376, %v377
        %v379 = vrot.slane %v259, 1
        %v380 = vsel %vm335, %v377, %v379
        %v381 = vrot.slane %v260, 1
        %v382 = vrot.slane %v261, 1
        %v383 = vsel %vm335, %v381, %v382
        %v384 = vrot.slane %v262, 1
        %v385 = vsel %vm335, %v382, %v384
        %v386 = vrot.slane %v263, 1
        %v387 = vrot.slane %v264, 1
        %v388 = vsel %vm335, %v386, %v387
        %v389 = vrot.slane %v265, 1
        %v390 = vsel %vm335, %v387, %v389
        %v391 = vrot.slane %v266, 1
        %v392 = vrot.slane %v267, 1
        %v393 = vsel %vm335, %v391, %v392
        %v394 = vrot.slane %v268, 1
        %v395 = vsel %vm335, %v392, %v394
        %v396 = vrot.slane %v269, 1
        %v397 = vrot.slane %v270, 1
        %v398 = vsel %vm335, %v396, %v397
        %v399 = vrot.slane %v271, 1
        %v400 = vsel %vm335, %v397, %v399
        %v401 = vrot.slane %v272, 1
        %v402 = vrot.slane %v273, 1
        %v403 = vsel %vm335, %v401, %v402
        %v404 = vrot.slane %v274, 1
        %v405 = vsel %vm335, %v402, %v404
        %v406 = vrot.slane %v275, 1
        %v407 = vrot.slane %v276, 1
        %v408 = vsel %vm335, %v406, %v407
        %v409 = vrot.slane %v277, 1
        %v410 = vsel %vm335, %v407, %v409
        %v411 = vrot.slane %v278, 1
        %v412 = vrot.slane %v279, 1
        %v413 = vsel %vm335, %v411, %v412
        %v414 = vrot.slane %v280, 1
        %v415 = vsel %vm335, %v412, %v414
        %416 = vrot.lane.b32.xlu0 %v338, 4
        %v417 = vpop.permute.xlu0 %416
        %418 = vrot.lane.b32.xlu0 %v340, 4
        %v419 = vpop.permute.xlu0 %418
        %420 = vrot.lane.b32.xlu0 %v343, 4
        %v421 = vpop.permute.xlu0 %420
        %422 = vrot.lane.b32.xlu0 %v345, 4
        %v423 = vpop.permute.xlu0 %422
        %424 = vrot.lane.b32.xlu0 %v348, 4
        %v425 = vpop.permute.xlu0 %424
        %426 = vrot.lane.b32.xlu0 %v350, 4
        %v427 = vpop.permute.xlu0 %426
        %428 = vrot.lane.b32.xlu0 %v353, 4
        %v429 = vpop.permute.xlu0 %428
        %430 = vrot.lane.b32.xlu0 %v355, 4
        %v431 = vpop.permute.xlu0 %430
        %432 = vrot.lane.b32.xlu0 %v358, 4
        %v433 = vpop.permute.xlu0 %432
        %434 = vrot.lane.b32.xlu0 %v360, 4
        %v435 = vpop.permute.xlu0 %434
        %436 = vrot.lane.b32.xlu0 %v363, 4
        %v437 = vpop.permute.xlu0 %436
        %438 = vrot.lane.b32.xlu0 %v365, 4
        %v439 = vpop.permute.xlu0 %438
        %440 = vrot.lane.b32.xlu0 %v368, 4
        %v441 = vpop.permute.xlu0 %440
        %442 = vrot.lane.b32.xlu0 %v370, 4
        %v443 = vpop.permute.xlu0 %442
        %444 = vrot.lane.b32.xlu0 %v373, 4
        %v445 = vpop.permute.xlu0 %444
        %446 = vrot.lane.b32.xlu0 %v375, 4
        %v447 = vpop.permute.xlu0 %446
        %448 = vrot.lane.b32.xlu0 %v378, 4
        %v449 = vpop.permute.xlu0 %448
        %450 = vrot.lane.b32.xlu0 %v380, 4
        %v451 = vpop.permute.xlu0 %450
        %452 = vrot.lane.b32.xlu0 %v383, 4
        %v453 = vpop.permute.xlu0 %452
        %454 = vrot.lane.b32.xlu0 %v385, 4
        %v455 = vpop.permute.xlu0 %454
        %456 = vrot.lane.b32.xlu0 %v388, 4
        %v457 = vpop.permute.xlu0 %456
        %458 = vrot.lane.b32.xlu0 %v390, 4
        %v459 = vpop.permute.xlu0 %458
        %460 = vrot.lane.b32.xlu0 %v393, 4
        %v461 = vpop.permute.xlu0 %460
        %462 = vrot.lane.b32.xlu0 %v395, 4
        %v463 = vpop.permute.xlu0 %462
        %464 = vrot.lane.b32.xlu0 %v398, 4
        %v465 = vpop.permute.xlu0 %464
        %466 = vrot.lane.b32.xlu0 %v400, 4
        %v467 = vpop.permute.xlu0 %466
        %468 = vrot.lane.b32.xlu0 %v403, 4
        %v469 = vpop.permute.xlu0 %468
        %470 = vrot.lane.b32.xlu0 %v405, 4
        %v471 = vpop.permute.xlu0 %470
        %472 = vrot.lane.b32.xlu0 %v408, 4
        %v473 = vpop.permute.xlu0 %472
        %474 = vrot.lane.b32.xlu0 %v410, 4
        %v475 = vpop.permute.xlu0 %474
        %476 = vrot.lane.b32.xlu0 %v413, 4
        %v477 = vpop.permute.xlu0 %476
        %478 = vrot.lane.b32.xlu0 %v415, 4
        %v479 = vpop.permute.xlu0 %478
        %vm512 = vcmask 1045504
        %v513 = vrot.slane %v233, 2
        %v514 = vrot.slane %v234, 2
        %v515 = vsel %vm512, %v513, %v514
        %v516 = vrot.slane %v235, 2
        %v517 = vsel %vm512, %v514, %v516
        %v518 = vrot.slane %v236, 2
        %v519 = vrot.slane %v237, 2
        %v520 = vsel %vm512, %v518, %v519
        %v521 = vrot.slane %v238, 2
        %v522 = vsel %vm512, %v519, %v521
        %v523 = vrot.slane %v239, 2
        %v524 = vrot.slane %v240, 2
        %v525 = vsel %vm512, %v523, %v524
        %v526 = vrot.slane %v241, 2
        %v527 = vsel %vm512, %v524, %v526
        %v528 = vrot.slane %v242, 2
        %v529 = vrot.slane %v243, 2
        %v530 = vsel %vm512, %v528, %v529
        %v531 = vrot.slane %v244, 2
        %v532 = vsel %vm512, %v529, %v531
        %v533 = vrot.slane %v245, 2
        %v534 = vrot.slane %v246, 2
        %v535 = vsel %vm512, %v533, %v534
        %v536 = vrot.slane %v247, 2
        %v537 = vsel %vm512, %v534, %v536
        %v538 = vrot.slane %v248, 2
        %v539 = vrot.slane %v249, 2
        %v540 = vsel %vm512, %v538, %v539
        %v541 = vrot.slane %v250, 2
        %v542 = vsel %vm512, %v539, %v541
        %v543 = vrot.slane %v251, 2
        %v544 = vrot.slane %v252, 2
        %v545 = vsel %vm512, %v543, %v544
        %v546 = vrot.slane %v253, 2
        %v547 = vsel %vm512, %v544, %v546
        %v548 = vrot.slane %v254, 2
        %v549 = vrot.slane %v255, 2
        %v550 = vsel %vm512, %v548, %v549
        %v551 = vrot.slane %v256, 2
        %v552 = vsel %vm512, %v549, %v551
        %v553 = vrot.slane %v257, 2
        %v554 = vrot.slane %v258, 2
        %v555 = vsel %vm512, %v553, %v554
        %v556 = vrot.slane %v259, 2
        %v557 = vsel %vm512, %v554, %v556
        %v558 = vrot.slane %v260, 2
        %v559 = vrot.slane %v261, 2
        %v560 = vsel %vm512, %v558, %v559
        %v561 = vrot.slane %v262, 2
        %v562 = vsel %vm512, %v559, %v561
        %v563 = vrot.slane %v263, 2
        %v564 = vrot.slane %v264, 2
        %v565 = vsel %vm512, %v563, %v564
        %v566 = vrot.slane %v265, 2
        %v567 = vsel %vm512, %v564, %v566
        %v568 = vrot.slane %v266, 2
        %v569 = vrot.slane %v267, 2
        %v570 = vsel %vm512, %v568, %v569
        %v571 = vrot.slane %v268, 2
        %v572 = vsel %vm512, %v569, %v571
        %v573 = vrot.slane %v269, 2
        %v574 = vrot.slane %v270, 2
        %v575 = vsel %vm512, %v573, %v574
        %v576 = vrot.slane %v271, 2
        %v577 = vsel %vm512, %v574, %v576
        %v578 = vrot.slane %v272, 2
        %v579 = vrot.slane %v273, 2
        %v580 = vsel %vm512, %v578, %v579
        %v581 = vrot.slane %v274, 2
        %v582 = vsel %vm512, %v579, %v581
        %v583 = vrot.slane %v275, 2
        %v584 = vrot.slane %v276, 2
        %v585 = vsel %vm512, %v583, %v584
        %v586 = vrot.slane %v277, 2
        %v587 = vsel %vm512, %v584, %v586
        %v588 = vrot.slane %v278, 2
        %v589 = vrot.slane %v279, 2
        %v590 = vsel %vm512, %v588, %v589
        %v591 = vrot.slane %v280, 2
        %v592 = vsel %vm512, %v589, %v591
        %593 = vrot.lane.b32.xlu0 %v515, 8
        %v594 = vpop.permute.xlu0 %593
        %595 = vrot.lane.b32.xlu0 %v517, 8
        %v596 = vpop.permute.xlu0 %595
        %597 = vrot.lane.b32.xlu0 %v520, 8
        %v598 = vpop.permute.xlu0 %597
        %599 = vrot.lane.b32.xlu0 %v522, 8
        %v600 = vpop.permute.xlu0 %599
        %601 = vrot.lane.b32.xlu0 %v525, 8
        %v602 = vpop.permute.xlu0 %601
        %603 = vrot.lane.b32.xlu0 %v527, 8
        %v604 = vpop.permute.xlu0 %603
        %605 = vrot.lane.b32.xlu0 %v530, 8
        %v606 = vpop.permute.xlu0 %605
        %607 = vrot.lane.b32.xlu0 %v532, 8
        %v608 = vpop.permute.xlu0 %607
        %609 = vrot.lane.b32.xlu0 %v535, 8
        %v610 = vpop.permute.xlu0 %609
        %611 = vrot.lane.b32.xlu0 %v537, 8
        %v612 = vpop.permute.xlu0 %611
        %613 = vrot.lane.b32.xlu0 %v540, 8
        %v614 = vpop.permute.xlu0 %613
        %615 = vrot.lane.b32.xlu0 %v542, 8
        %v616 = vpop.permute.xlu0 %615
        %617 = vrot.lane.b32.xlu0 %v545, 8
        %v618 = vpop.permute.xlu0 %617
        %619 = vrot.lane.b32.xlu0 %v547, 8
        %v620 = vpop.permute.xlu0 %619
        %621 = vrot.lane.b32.xlu0 %v550, 8
        %v622 = vpop.permute.xlu0 %621
        %623 = vrot.lane.b32.xlu0 %v552, 8
        %v624 = vpop.permute.xlu0 %623
        %625 = vrot.lane.b32.xlu0 %v555, 8
        %v626 = vpop.permute.xlu0 %625
        %627 = vrot.lane.b32.xlu0 %v557, 8
        %v628 = vpop.permute.xlu0 %627
        %629 = vrot.lane.b32.xlu0 %v560, 8
        %v630 = vpop.permute.xlu0 %629
        %631 = vrot.lane.b32.xlu0 %v562, 8
        %v632 = vpop.permute.xlu0 %631
        %633 = vrot.lane.b32.xlu0 %v565, 8
        %v634 = vpop.permute.xlu0 %633
        %635 = vrot.lane.b32.xlu0 %v567, 8
        %v636 = vpop.permute.xlu0 %635
        %637 = vrot.lane.b32.xlu0 %v570, 8
        %v638 = vpop.permute.xlu0 %637
        %639 = vrot.lane.b32.xlu0 %v572, 8
        %v640 = vpop.permute.xlu0 %639
        %641 = vrot.lane.b32.xlu0 %v575, 8
        %v642 = vpop.permute.xlu0 %641
        %643 = vrot.lane.b32.xlu0 %v577, 8
        %v644 = vpop.permute.xlu0 %643
        %645 = vrot.lane.b32.xlu0 %v580, 8
        %v646 = vpop.permute.xlu0 %645
        %647 = vrot.lane.b32.xlu0 %v582, 8
        %v648 = vpop.permute.xlu0 %647
        %649 = vrot.lane.b32.xlu0 %v585, 8
        %v650 = vpop.permute.xlu0 %649
        %651 = vrot.lane.b32.xlu0 %v587, 8
        %v652 = vpop.permute.xlu0 %651
        %653 = vrot.lane.b32.xlu0 %v590, 8
        %v654 = vpop.permute.xlu0 %653
        %655 = vrot.lane.b32.xlu0 %v592, 8
        %v656 = vpop.permute.xlu0 %655
        %691 = vrot.lane.b32.xlu0 %v236, 12
        %v692 = vpop.permute.xlu0 %691
        %693 = vrot.lane.b32.xlu0 %v237, 12
        %v694 = vpop.permute.xlu0 %693
        %695 = vrot.lane.b32.xlu0 %v239, 12
        %v696 = vpop.permute.xlu0 %695
        %697 = vrot.lane.b32.xlu0 %v240, 12
        %v698 = vpop.permute.xlu0 %697
        %699 = vrot.lane.b32.xlu0 %v242, 12
        %v700 = vpop.permute.xlu0 %699
        %701 = vrot.lane.b32.xlu0 %v243, 12
        %v702 = vpop.permute.xlu0 %701
        %703 = vrot.lane.b32.xlu0 %v245, 12
        %v704 = vpop.permute.xlu0 %703
        %705 = vrot.lane.b32.xlu0 %v246, 12
        %v706 = vpop.permute.xlu0 %705
        %707 = vrot.lane.b32.xlu0 %v248, 12
        %v708 = vpop.permute.xlu0 %707
        %709 = vrot.lane.b32.xlu0 %v249, 12
        %v710 = vpop.permute.xlu0 %709
        %711 = vrot.lane.b32.xlu0 %v251, 12
        %v712 = vpop.permute.xlu0 %711
        %713 = vrot.lane.b32.xlu0 %v252, 12
        %v714 = vpop.permute.xlu0 %713
        %715 = vrot.lane.b32.xlu0 %v254, 12
        %v716 = vpop.permute.xlu0 %715
        %717 = vrot.lane.b32.xlu0 %v255, 12
        %v718 = vpop.permute.xlu0 %717
        %719 = vrot.lane.b32.xlu0 %v257, 12
        %v720 = vpop.permute.xlu0 %719
        %721 = vrot.lane.b32.xlu0 %v258, 12
        %v722 = vpop.permute.xlu0 %721
        %723 = vrot.lane.b32.xlu0 %v260, 12
        %v724 = vpop.permute.xlu0 %723
        %725 = vrot.lane.b32.xlu0 %v261, 12
        %v726 = vpop.permute.xlu0 %725
        %727 = vrot.lane.b32.xlu0 %v263, 12
        %v728 = vpop.permute.xlu0 %727
        %729 = vrot.lane.b32.xlu0 %v264, 12
        %v730 = vpop.permute.xlu0 %729
        %731 = vrot.lane.b32.xlu0 %v266, 12
        %v732 = vpop.permute.xlu0 %731
        %733 = vrot.lane.b32.xlu0 %v267, 12
        %v734 = vpop.permute.xlu0 %733
        %735 = vrot.lane.b32.xlu0 %v269, 12
        %v736 = vpop.permute.xlu0 %735
        %737 = vrot.lane.b32.xlu0 %v270, 12
        %v738 = vpop.permute.xlu0 %737
        %739 = vrot.lane.b32.xlu0 %v272, 12
        %v740 = vpop.permute.xlu0 %739
        %741 = vrot.lane.b32.xlu0 %v273, 12
        %v742 = vpop.permute.xlu0 %741
        %743 = vrot.lane.b32.xlu0 %v275, 12
        %v744 = vpop.permute.xlu0 %743
        %745 = vrot.lane.b32.xlu0 %v276, 12
        %v746 = vpop.permute.xlu0 %745
        %747 = vrot.lane.b32.xlu0 %v278, 12
        %v748 = vpop.permute.xlu0 %747
        %749 = vrot.lane.b32.xlu0 %v279, 12
        %v750 = vpop.permute.xlu0 %749
        %751 = vrot.lane.b32.xlu0 %v281, 12
        %v752 = vpop.permute.xlu0 %751
        %753 = vrot.lane.b32.xlu0 %v282, 12
        %v754 = vpop.permute.xlu0 %753
        %v788 = vrot.slane %v281, 1
        %v789 = vrot.slane %v282, 1
        %v790 = vsel %vm335, %v788, %v789
        %v791 = vrot.slane %v283, 1
        %v792 = vsel %vm335, %v789, %v791
        %793 = vrot.lane.b32.xlu0 %v343, 16
        %v794 = vpop.permute.xlu0 %793
        %795 = vrot.lane.b32.xlu0 %v345, 16
        %v796 = vpop.permute.xlu0 %795
        %797 = vrot.lane.b32.xlu0 %v348, 16
        %v798 = vpop.permute.xlu0 %797
        %799 = vrot.lane.b32.xlu0 %v350, 16
        %v800 = vpop.permute.xlu0 %799
        %801 = vrot.lane.b32.xlu0 %v353, 16
        %v802 = vpop.permute.xlu0 %801
        %803 = vrot.lane.b32.xlu0 %v355, 16
        %v804 = vpop.permute.xlu0 %803
        %805 = vrot.lane.b32.xlu0 %v358, 16
        %v806 = vpop.permute.xlu0 %805
        %807 = vrot.lane.b32.xlu0 %v360, 16
        %v808 = vpop.permute.xlu0 %807
        %809 = vrot.lane.b32.xlu0 %v363, 16
        %v810 = vpop.permute.xlu0 %809
        %811 = vrot.lane.b32.xlu0 %v365, 16
        %v812 = vpop.permute.xlu0 %811
        %813 = vrot.lane.b32.xlu0 %v368, 16
        %v814 = vpop.permute.xlu0 %813
        %815 = vrot.lane.b32.xlu0 %v370, 16
        %v816 = vpop.permute.xlu0 %815
        %817 = vrot.lane.b32.xlu0 %v373, 16
        %v818 = vpop.permute.xlu0 %817
        %819 = vrot.lane.b32.xlu0 %v375, 16
        %v820 = vpop.permute.xlu0 %819
        %821 = vrot.lane.b32.xlu0 %v378, 16
        %v822 = vpop.permute.xlu0 %821
        %823 = vrot.lane.b32.xlu0 %v380, 16
        %v824 = vpop.permute.xlu0 %823
        %825 = vrot.lane.b32.xlu0 %v383, 16
        %v826 = vpop.permute.xlu0 %825
        %827 = vrot.lane.b32.xlu0 %v385, 16
        %v828 = vpop.permute.xlu0 %827
        %829 = vrot.lane.b32.xlu0 %v388, 16
        %v830 = vpop.permute.xlu0 %829
        %831 = vrot.lane.b32.xlu0 %v390, 16
        %v832 = vpop.permute.xlu0 %831
        %833 = vrot.lane.b32.xlu0 %v393, 16
        %v834 = vpop.permute.xlu0 %833
        %835 = vrot.lane.b32.xlu0 %v395, 16
        %v836 = vpop.permute.xlu0 %835
        %837 = vrot.lane.b32.xlu0 %v398, 16
        %v838 = vpop.permute.xlu0 %837
        %839 = vrot.lane.b32.xlu0 %v400, 16
        %v840 = vpop.permute.xlu0 %839
        %841 = vrot.lane.b32.xlu0 %v403, 16
        %v842 = vpop.permute.xlu0 %841
        %843 = vrot.lane.b32.xlu0 %v405, 16
        %v844 = vpop.permute.xlu0 %843
        %845 = vrot.lane.b32.xlu0 %v408, 16
        %v846 = vpop.permute.xlu0 %845
        %847 = vrot.lane.b32.xlu0 %v410, 16
        %v848 = vpop.permute.xlu0 %847
        %849 = vrot.lane.b32.xlu0 %v413, 16
        %v850 = vpop.permute.xlu0 %849
        %851 = vrot.lane.b32.xlu0 %v415, 16
        %v852 = vpop.permute.xlu0 %851
        %853 = vrot.lane.b32.xlu0 %v790, 16
        %v854 = vpop.permute.xlu0 %853
        %855 = vrot.lane.b32.xlu0 %v792, 16
        %v856 = vpop.permute.xlu0 %855
        %v889 = vrot.slane %v281, 2
        %v890 = vrot.slane %v282, 2
        %v891 = vsel %vm512, %v889, %v890
        %v892 = vrot.slane %v283, 2
        %v893 = vsel %vm512, %v890, %v892
        %894 = vrot.lane.b32.xlu0 %v520, 20
        %v895 = vpop.permute.xlu0 %894
        %896 = vrot.lane.b32.xlu0 %v522, 20
        %v897 = vpop.permute.xlu0 %896
        %898 = vrot.lane.b32.xlu0 %v525, 20
        %v899 = vpop.permute.xlu0 %898
        %900 = vrot.lane.b32.xlu0 %v527, 20
        %v901 = vpop.permute.xlu0 %900
        %902 = vrot.lane.b32.xlu0 %v530, 20
        %v903 = vpop.permute.xlu0 %902
        %904 = vrot.lane.b32.xlu0 %v532, 20
        %v905 = vpop.permute.xlu0 %904
        %906 = vrot.lane.b32.xlu0 %v535, 20
        %v907 = vpop.permute.xlu0 %906
        %908 = vrot.lane.b32.xlu0 %v537, 20
        %v909 = vpop.permute.xlu0 %908
        %910 = vrot.lane.b32.xlu0 %v540, 20
        %v911 = vpop.permute.xlu0 %910
        %912 = vrot.lane.b32.xlu0 %v542, 20
        %v913 = vpop.permute.xlu0 %912
        %914 = vrot.lane.b32.xlu0 %v545, 20
        %v915 = vpop.permute.xlu0 %914
        %916 = vrot.lane.b32.xlu0 %v547, 20
        %v917 = vpop.permute.xlu0 %916
        %918 = vrot.lane.b32.xlu0 %v550, 20
        %v919 = vpop.permute.xlu0 %918
        %920 = vrot.lane.b32.xlu0 %v552, 20
        %v921 = vpop.permute.xlu0 %920
        %922 = vrot.lane.b32.xlu0 %v555, 20
        %v923 = vpop.permute.xlu0 %922
        %924 = vrot.lane.b32.xlu0 %v557, 20
        %v925 = vpop.permute.xlu0 %924
        %926 = vrot.lane.b32.xlu0 %v560, 20
        %v927 = vpop.permute.xlu0 %926
        %928 = vrot.lane.b32.xlu0 %v562, 20
        %v929 = vpop.permute.xlu0 %928
        %930 = vrot.lane.b32.xlu0 %v565, 20
        %v931 = vpop.permute.xlu0 %930
        %932 = vrot.lane.b32.xlu0 %v567, 20
        %v933 = vpop.permute.xlu0 %932
        %934 = vrot.lane.b32.xlu0 %v570, 20
        %v935 = vpop.permute.xlu0 %934
        %936 = vrot.lane.b32.xlu0 %v572, 20
        %v937 = vpop.permute.xlu0 %936
        %938 = vrot.lane.b32.xlu0 %v575, 20
        %v939 = vpop.permute.xlu0 %938
        %940 = vrot.lane.b32.xlu0 %v577, 20
        %v941 = vpop.permute.xlu0 %940
        %942 = vrot.lane.b32.xlu0 %v580, 20
        %v943 = vpop.permute.xlu0 %942
        %944 = vrot.lane.b32.xlu0 %v582, 20
        %v945 = vpop.permute.xlu0 %944
        %946 = vrot.lane.b32.xlu0 %v585, 20
        %v947 = vpop.permute.xlu0 %946
        %948 = vrot.lane.b32.xlu0 %v587, 20
        %v949 = vpop.permute.xlu0 %948
        %950 = vrot.lane.b32.xlu0 %v590, 20
        %v951 = vpop.permute.xlu0 %950
        %952 = vrot.lane.b32.xlu0 %v592, 20
        %v953 = vpop.permute.xlu0 %952
        %954 = vrot.lane.b32.xlu0 %v891, 20
        %v955 = vpop.permute.xlu0 %954
        %956 = vrot.lane.b32.xlu0 %v893, 20
        %v957 = vpop.permute.xlu0 %956
        %992 = vrot.lane.b32.xlu0 %v239, 24
        %v993 = vpop.permute.xlu0 %992
        %994 = vrot.lane.b32.xlu0 %v240, 24
        %v995 = vpop.permute.xlu0 %994
        %996 = vrot.lane.b32.xlu0 %v242, 24
        %v997 = vpop.permute.xlu0 %996
        %998 = vrot.lane.b32.xlu0 %v243, 24
        %v999 = vpop.permute.xlu0 %998
        %1000 = vrot.lane.b32.xlu0 %v245, 24
        %v1001 = vpop.permute.xlu0 %1000
        %1002 = vrot.lane.b32.xlu0 %v246, 24
        %v1003 = vpop.permute.xlu0 %1002
        %1004 = vrot.lane.b32.xlu0 %v248, 24
        %v1005 = vpop.permute.xlu0 %1004
        %1006 = vrot.lane.b32.xlu0 %v249, 24
        %v1007 = vpop.permute.xlu0 %1006
        %1008 = vrot.lane.b32.xlu0 %v251, 24
        %v1009 = vpop.permute.xlu0 %1008
        %1010 = vrot.lane.b32.xlu0 %v252, 24
        %v1011 = vpop.permute.xlu0 %1010
        %1012 = vrot.lane.b32.xlu0 %v254, 24
        %v1013 = vpop.permute.xlu0 %1012
        %1014 = vrot.lane.b32.xlu0 %v255, 24
        %v1015 = vpop.permute.xlu0 %1014
        %1016 = vrot.lane.b32.xlu0 %v257, 24
        %v1017 = vpop.permute.xlu0 %1016
        %1018 = vrot.lane.b32.xlu0 %v258, 24
        %v1019 = vpop.permute.xlu0 %1018
        %1020 = vrot.lane.b32.xlu0 %v260, 24
        %v1021 = vpop.permute.xlu0 %1020
        %1022 = vrot.lane.b32.xlu0 %v261, 24
        %v1023 = vpop.permute.xlu0 %1022
        %1024 = vrot.lane.b32.xlu0 %v263, 24
        %v1025 = vpop.permute.xlu0 %1024
        %1026 = vrot.lane.b32.xlu0 %v264, 24
        %v1027 = vpop.permute.xlu0 %1026
        %1028 = vrot.lane.b32.xlu0 %v266, 24
        %v1029 = vpop.permute.xlu0 %1028
        %1030 = vrot.lane.b32.xlu0 %v267, 24
        %v1031 = vpop.permute.xlu0 %1030
        %1032 = vrot.lane.b32.xlu0 %v269, 24
        %v1033 = vpop.permute.xlu0 %1032
        %1034 = vrot.lane.b32.xlu0 %v270, 24
        %v1035 = vpop.permute.xlu0 %1034
        %1036 = vrot.lane.b32.xlu0 %v272, 24
        %v1037 = vpop.permute.xlu0 %1036
        %1038 = vrot.lane.b32.xlu0 %v273, 24
        %v1039 = vpop.permute.xlu0 %1038
        %1040 = vrot.lane.b32.xlu0 %v275, 24
        %v1041 = vpop.permute.xlu0 %1040
        %1042 = vrot.lane.b32.xlu0 %v276, 24
        %v1043 = vpop.permute.xlu0 %1042
        %1044 = vrot.lane.b32.xlu0 %v278, 24
        %v1045 = vpop.permute.xlu0 %1044
        %1046 = vrot.lane.b32.xlu0 %v279, 24
        %v1047 = vpop.permute.xlu0 %1046
        %1048 = vrot.lane.b32.xlu0 %v281, 24
        %v1049 = vpop.permute.xlu0 %1048
        %1050 = vrot.lane.b32.xlu0 %v282, 24
        %v1051 = vpop.permute.xlu0 %1050
        %1052 = vrot.lane.b32.xlu0 %v284, 24
        %v1053 = vpop.permute.xlu0 %1052
        %1054 = vrot.lane.b32.xlu0 %v285, 24
        %v1055 = vpop.permute.xlu0 %1054
        %v1089 = vrot.slane %v284, 1
        %v1090 = vrot.slane %v285, 1
        %v1091 = vsel %vm335, %v1089, %v1090
        %v1092 = vrot.slane %v286, 1
        %v1093 = vsel %vm335, %v1090, %v1092
        %1094 = vrot.lane.b32.xlu0 %v348, 28
        %v1095 = vpop.permute.xlu0 %1094
        %1096 = vrot.lane.b32.xlu0 %v350, 28
        %v1097 = vpop.permute.xlu0 %1096
        %1098 = vrot.lane.b32.xlu0 %v353, 28
        %v1099 = vpop.permute.xlu0 %1098
        %1100 = vrot.lane.b32.xlu0 %v355, 28
        %v1101 = vpop.permute.xlu0 %1100
        %1102 = vrot.lane.b32.xlu0 %v358, 28
        %v1103 = vpop.permute.xlu0 %1102
        %1104 = vrot.lane.b32.xlu0 %v360, 28
        %v1105 = vpop.permute.xlu0 %1104
        %1106 = vrot.lane.b32.xlu0 %v363, 28
        %v1107 = vpop.permute.xlu0 %1106
        %1108 = vrot.lane.b32.xlu0 %v365, 28
        %v1109 = vpop.permute.xlu0 %1108
        %1110 = vrot.lane.b32.xlu0 %v368, 28
        %v1111 = vpop.permute.xlu0 %1110
        %1112 = vrot.lane.b32.xlu0 %v370, 28
        %v1113 = vpop.permute.xlu0 %1112
        %1114 = vrot.lane.b32.xlu0 %v373, 28
        %v1115 = vpop.permute.xlu0 %1114
        %1116 = vrot.lane.b32.xlu0 %v375, 28
        %v1117 = vpop.permute.xlu0 %1116
        %1118 = vrot.lane.b32.xlu0 %v378, 28
        %v1119 = vpop.permute.xlu0 %1118
        %1120 = vrot.lane.b32.xlu0 %v380, 28
        %v1121 = vpop.permute.xlu0 %1120
        %1122 = vrot.lane.b32.xlu0 %v383, 28
        %v1123 = vpop.permute.xlu0 %1122
        %1124 = vrot.lane.b32.xlu0 %v385, 28
        %v1125 = vpop.permute.xlu0 %1124
        %1126 = vrot.lane.b32.xlu0 %v388, 28
        %v1127 = vpop.permute.xlu0 %1126
        %1128 = vrot.lane.b32.xlu0 %v390, 28
        %v1129 = vpop.permute.xlu0 %1128
        %1130 = vrot.lane.b32.xlu0 %v393, 28
        %v1131 = vpop.permute.xlu0 %1130
        %1132 = vrot.lane.b32.xlu0 %v395, 28
        %v1133 = vpop.permute.xlu0 %1132
        %1134 = vrot.lane.b32.xlu0 %v398, 28
        %v1135 = vpop.permute.xlu0 %1134
        %1136 = vrot.lane.b32.xlu0 %v400, 28
        %v1137 = vpop.permute.xlu0 %1136
        %1138 = vrot.lane.b32.xlu0 %v403, 28
        %v1139 = vpop.permute.xlu0 %1138
        %1140 = vrot.lane.b32.xlu0 %v405, 28
        %v1141 = vpop.permute.xlu0 %1140
        %1142 = vrot.lane.b32.xlu0 %v408, 28
        %v1143 = vpop.permute.xlu0 %1142
        %1144 = vrot.lane.b32.xlu0 %v410, 28
        %v1145 = vpop.permute.xlu0 %1144
        %1146 = vrot.lane.b32.xlu0 %v413, 28
        %v1147 = vpop.permute.xlu0 %1146
        %1148 = vrot.lane.b32.xlu0 %v415, 28
        %v1149 = vpop.permute.xlu0 %1148
        %1150 = vrot.lane.b32.xlu0 %v790, 28
        %v1151 = vpop.permute.xlu0 %1150
        %1152 = vrot.lane.b32.xlu0 %v792, 28
        %v1153 = vpop.permute.xlu0 %1152
        %1154 = vrot.lane.b32.xlu0 %v1091, 28
        %v1155 = vpop.permute.xlu0 %1154
        %1156 = vrot.lane.b32.xlu0 %v1093, 28
        %v1157 = vpop.permute.xlu0 %1156
        %v1190 = vrot.slane %v284, 2
        %v1191 = vrot.slane %v285, 2
        %v1192 = vsel %vm512, %v1190, %v1191
        %v1193 = vrot.slane %v286, 2
        %v1194 = vsel %vm512, %v1191, %v1193
        %1195 = vrot.lane.b32.xlu0 %v525, 32
        %v1196 = vpop.permute.xlu0 %1195
        %1197 = vrot.lane.b32.xlu0 %v527, 32
        %v1198 = vpop.permute.xlu0 %1197
        %1199 = vrot.lane.b32.xlu0 %v530, 32
        %v1200 = vpop.permute.xlu0 %1199
        %1201 = vrot.lane.b32.xlu0 %v532, 32
        %v1202 = vpop.permute.xlu0 %1201
        %1203 = vrot.lane.b32.xlu0 %v535, 32
        %v1204 = vpop.permute.xlu0 %1203
        %1205 = vrot.lane.b32.xlu0 %v537, 32
        %v1206 = vpop.permute.xlu0 %1205
        %1207 = vrot.lane.b32.xlu0 %v540, 32
        %v1208 = vpop.permute.xlu0 %1207
        %1209 = vrot.lane.b32.xlu0 %v542, 32
        %v1210 = vpop.permute.xlu0 %1209
        %1211 = vrot.lane.b32.xlu0 %v545, 32
        %v1212 = vpop.permute.xlu0 %1211
        %1213 = vrot.lane.b32.xlu0 %v547, 32
        %v1214 = vpop.permute.xlu0 %1213
        %1215 = vrot.lane.b32.xlu0 %v550, 32
        %v1216 = vpop.permute.xlu0 %1215
        %1217 = vrot.lane.b32.xlu0 %v552, 32
        %v1218 = vpop.permute.xlu0 %1217
        %1219 = vrot.lane.b32.xlu0 %v555, 32
        %v1220 = vpop.permute.xlu0 %1219
        %1221 = vrot.lane.b32.xlu0 %v557, 32
        %v1222 = vpop.permute.xlu0 %1221
        %1223 = vrot.lane.b32.xlu0 %v560, 32
        %v1224 = vpop.permute.xlu0 %1223
        %1225 = vrot.lane.b32.xlu0 %v562, 32
        %v1226 = vpop.permute.xlu0 %1225
        %1227 = vrot.lane.b32.xlu0 %v565, 32
        %v1228 = vpop.permute.xlu0 %1227
        %1229 = vrot.lane.b32.xlu0 %v567, 32
        %v1230 = vpop.permute.xlu0 %1229
        %1231 = vrot.lane.b32.xlu0 %v570, 32
        %v1232 = vpop.permute.xlu0 %1231
        %1233 = vrot.lane.b32.xlu0 %v572, 32
        %v1234 = vpop.permute.xlu0 %1233
        %1235 = vrot.lane.b32.xlu0 %v575, 32
        %v1236 = vpop.permute.xlu0 %1235
        %1237 = vrot.lane.b32.xlu0 %v577, 32
        %v1238 = vpop.permute.xlu0 %1237
        %1239 = vrot.lane.b32.xlu0 %v580, 32
        %v1240 = vpop.permute.xlu0 %1239
        %1241 = vrot.lane.b32.xlu0 %v582, 32
        %v1242 = vpop.permute.xlu0 %1241
        %1243 = vrot.lane.b32.xlu0 %v585, 32
        %v1244 = vpop.permute.xlu0 %1243
        %1245 = vrot.lane.b32.xlu0 %v587, 32
        %v1246 = vpop.permute.xlu0 %1245
        %1247 = vrot.lane.b32.xlu0 %v590, 32
        %v1248 = vpop.permute.xlu0 %1247
        %1249 = vrot.lane.b32.xlu0 %v592, 32
        %v1250 = vpop.permute.xlu0 %1249
        %1251 = vrot.lane.b32.xlu0 %v891, 32
        %v1252 = vpop.permute.xlu0 %1251
        %1253 = vrot.lane.b32.xlu0 %v893, 32
        %v1254 = vpop.permute.xlu0 %1253
        %1255 = vrot.lane.b32.xlu0 %v1192, 32
        %v1256 = vpop.permute.xlu0 %1255
        %1257 = vrot.lane.b32.xlu0 %v1194, 32
        %v1258 = vpop.permute.xlu0 %1257
        %vm1291 = vcmask 31744
        %v1292 = vsel %vm1291, %v233, %v417
        %v1293 = vsel %vm1291, %v234, %v419
        %v1294 = vsel %vm1291, %v236, %v421
        %v1295 = vsel %vm1291, %v237, %v423
        %v1296 = vsel %vm1291, %v239, %v425
        %v1297 = vsel %vm1291, %v240, %v427
        %v1298 = vsel %vm1291, %v242, %v429
        %v1299 = vsel %vm1291, %v243, %v431
        %v1300 = vsel %vm1291, %v245, %v433
        %v1301 = vsel %vm1291, %v246, %v435
        %v1302 = vsel %vm1291, %v248, %v437
        %v1303 = vsel %vm1291, %v249, %v439
        %v1304 = vsel %vm1291, %v251, %v441
        %v1305 = vsel %vm1291, %v252, %v443
        %v1306 = vsel %vm1291, %v254, %v445
        %v1307 = vsel %vm1291, %v255, %v447
        %v1308 = vsel %vm1291, %v257, %v449
        %v1309 = vsel %vm1291, %v258, %v451
        %v1310 = vsel %vm1291, %v260, %v453
        %v1311 = vsel %vm1291, %v261, %v455
        %v1312 = vsel %vm1291, %v263, %v457
        %v1313 = vsel %vm1291, %v264, %v459
        %v1314 = vsel %vm1291, %v266, %v461
        %v1315 = vsel %vm1291, %v267, %v463
        %v1316 = vsel %vm1291, %v269, %v465
        %v1317 = vsel %vm1291, %v270, %v467
        %v1318 = vsel %vm1291, %v272, %v469
        %v1319 = vsel %vm1291, %v273, %v471
        %v1320 = vsel %vm1291, %v275, %v473
        %v1321 = vsel %vm1291, %v276, %v475
        %v1322 = vsel %vm1291, %v278, %v477
        %v1323 = vsel %vm1291, %v279, %v479
        %vm1324 = vcmask 64512
        %v1325 = vsel %vm1324, %v1292, %v594
        %v1326 = vsel %vm1324, %v1293, %v596
        %v1327 = vsel %vm1324, %v1294, %v598
        %v1328 = vsel %vm1324, %v1295, %v600
        %v1329 = vsel %vm1324, %v1296, %v602
        %v1330 = vsel %vm1324, %v1297, %v604
        %v1331 = vsel %vm1324, %v1298, %v606
        %v1332 = vsel %vm1324, %v1299, %v608
        %v1333 = vsel %vm1324, %v1300, %v610
        %v1334 = vsel %vm1324, %v1301, %v612
        %v1335 = vsel %vm1324, %v1302, %v614
        %v1336 = vsel %vm1324, %v1303, %v616
        %v1337 = vsel %vm1324, %v1304, %v618
        %v1338 = vsel %vm1324, %v1305, %v620
        %v1339 = vsel %vm1324, %v1306, %v622
        %v1340 = vsel %vm1324, %v1307, %v624
        %v1341 = vsel %vm1324, %v1308, %v626
        %v1342 = vsel %vm1324, %v1309, %v628
        %v1343 = vsel %vm1324, %v1310, %v630
        %v1344 = vsel %vm1324, %v1311, %v632
        %v1345 = vsel %vm1324, %v1312, %v634
        %v1346 = vsel %vm1324, %v1313, %v636
        %v1347 = vsel %vm1324, %v1314, %v638
        %v1348 = vsel %vm1324, %v1315, %v640
        %v1349 = vsel %vm1324, %v1316, %v642
        %v1350 = vsel %vm1324, %v1317, %v644
        %v1351 = vsel %vm1324, %v1318, %v646
        %v1352 = vsel %vm1324, %v1319, %v648
        %v1353 = vsel %vm1324, %v1320, %v650
        %v1354 = vsel %vm1324, %v1321, %v652
        %v1355 = vsel %vm1324, %v1322, %v654
        %v1356 = vsel %vm1324, %v1323, %v656
        %vm1357 = vcmask 97280
        %v1358 = vsel %vm1357, %v1325, %v692
        %v1359 = vsel %vm1357, %v1326, %v694
        %v1360 = vsel %vm1357, %v1327, %v696
        %v1361 = vsel %vm1357, %v1328, %v698
        %v1362 = vsel %vm1357, %v1329, %v700
        %v1363 = vsel %vm1357, %v1330, %v702
        %v1364 = vsel %vm1357, %v1331, %v704
        %v1365 = vsel %vm1357, %v1332, %v706
        %v1366 = vsel %vm1357, %v1333, %v708
        %v1367 = vsel %vm1357, %v1334, %v710
        %v1368 = vsel %vm1357, %v1335, %v712
        %v1369 = vsel %vm1357, %v1336, %v714
        %v1370 = vsel %vm1357, %v1337, %v716
        %v1371 = vsel %vm1357, %v1338, %v718
        %v1372 = vsel %vm1357, %v1339, %v720
        %v1373 = vsel %vm1357, %v1340, %v722
        %v1374 = vsel %vm1357, %v1341, %v724
        %v1375 = vsel %vm1357, %v1342, %v726
        %v1376 = vsel %vm1357, %v1343, %v728
        %v1377 = vsel %vm1357, %v1344, %v730
        %v1378 = vsel %vm1357, %v1345, %v732
        %v1379 = vsel %vm1357, %v1346, %v734
        %v1380 = vsel %vm1357, %v1347, %v736
        %v1381 = vsel %vm1357, %v1348, %v738
        %v1382 = vsel %vm1357, %v1349, %v740
        %v1383 = vsel %vm1357, %v1350, %v742
        %v1384 = vsel %vm1357, %v1351, %v744
        %v1385 = vsel %vm1357, %v1352, %v746
        %v1386 = vsel %vm1357, %v1353, %v748
        %v1387 = vsel %vm1357, %v1354, %v750
        %v1388 = vsel %vm1357, %v1355, %v752
        %v1389 = vsel %vm1357, %v1356, %v754
        %vm1390 = vcmask 130048
        %v1391 = vsel %vm1390, %v1358, %v794
        %v1392 = vsel %vm1390, %v1359, %v796
        %v1393 = vsel %vm1390, %v1360, %v798
        %v1394 = vsel %vm1390, %v1361, %v800
        %v1395 = vsel %vm1390, %v1362, %v802
        %v1396 = vsel %vm1390, %v1363, %v804
        %v1397 = vsel %vm1390, %v1364, %v806
        %v1398 = vsel %vm1390, %v1365, %v808
        %v1399 = vsel %vm1390, %v1366, %v810
        %v1400 = vsel %vm1390, %v1367, %v812
        %v1401 = vsel %vm1390, %v1368, %v814
        %v1402 = vsel %vm1390, %v1369, %v816
        %v1403 = vsel %vm1390, %v1370, %v818
        %v1404 = vsel %vm1390, %v1371, %v820
        %v1405 = vsel %vm1390, %v1372, %v822
        %v1406 = vsel %vm1390, %v1373, %v824
        %v1407 = vsel %vm1390, %v1374, %v826
        %v1408 = vsel %vm1390, %v1375, %v828
        %v1409 = vsel %vm1390, %v1376, %v830
        %v1410 = vsel %vm1390, %v1377, %v832
        %v1411 = vsel %vm1390, %v1378, %v834
        %v1412 = vsel %vm1390, %v1379, %v836
        %v1413 = vsel %vm1390, %v1380, %v838
        %v1414 = vsel %vm1390, %v1381, %v840
        %v1415 = vsel %vm1390, %v1382, %v842
        %v1416 = vsel %vm1390, %v1383, %v844
        %v1417 = vsel %vm1390, %v1384, %v846
        %v1418 = vsel %vm1390, %v1385, %v848
        %v1419 = vsel %vm1390, %v1386, %v850
        %v1420 = vsel %vm1390, %v1387, %v852
        %v1421 = vsel %vm1390, %v1388, %v854
        %v1422 = vsel %vm1390, %v1389, %v856
        %vm1423 = vcmask 162816
        %v1424 = vsel %vm1423, %v1391, %v895
        %v1425 = vsel %vm1423, %v1392, %v897
        %v1426 = vsel %vm1423, %v1393, %v899
        %v1427 = vsel %vm1423, %v1394, %v901
        %v1428 = vsel %vm1423, %v1395, %v903
        %v1429 = vsel %vm1423, %v1396, %v905
        %v1430 = vsel %vm1423, %v1397, %v907
        %v1431 = vsel %vm1423, %v1398, %v909
        %v1432 = vsel %vm1423, %v1399, %v911
        %v1433 = vsel %vm1423, %v1400, %v913
        %v1434 = vsel %vm1423, %v1401, %v915
        %v1435 = vsel %vm1423, %v1402, %v917
        %v1436 = vsel %vm1423, %v1403, %v919
        %v1437 = vsel %vm1423, %v1404, %v921
        %v1438 = vsel %vm1423, %v1405, %v923
        %v1439 = vsel %vm1423, %v1406, %v925
        %v1440 = vsel %vm1423, %v1407, %v927
        %v1441 = vsel %vm1423, %v1408, %v929
        %v1442 = vsel %vm1423, %v1409, %v931
        %v1443 = vsel %vm1423, %v1410, %v933
        %v1444 = vsel %vm1423, %v1411, %v935
        %v1445 = vsel %vm1423, %v1412, %v937
        %v1446 = vsel %vm1423, %v1413, %v939
        %v1447 = vsel %vm1423, %v1414, %v941
        %v1448 = vsel %vm1423, %v1415, %v943
        %v1449 = vsel %vm1423, %v1416, %v945
        %v1450 = vsel %vm1423, %v1417, %v947
        %v1451 = vsel %vm1423, %v1418, %v949
        %v1452 = vsel %vm1423, %v1419, %v951
        %v1453 = vsel %vm1423, %v1420, %v953
        %v1454 = vsel %vm1423, %v1421, %v955
        %v1455 = vsel %vm1423, %v1422, %v957
        %vm1456 = vcmask 195584
        %v1457 = vsel %vm1456, %v1424, %v993
        %v1458 = vsel %vm1456, %v1425, %v995
        %v1459 = vsel %vm1456, %v1426, %v997
        %v1460 = vsel %vm1456, %v1427, %v999
        %v1461 = vsel %vm1456, %v1428, %v1001
        %v1462 = vsel %vm1456, %v1429, %v1003
        %v1463 = vsel %vm1456, %v1430, %v1005
        %v1464 = vsel %vm1456, %v1431, %v1007
        %v1465 = vsel %vm1456, %v1432, %v1009
        %v1466 = vsel %vm1456, %v1433, %v1011
        %v1467 = vsel %vm1456, %v1434, %v1013
        %v1468 = vsel %vm1456, %v1435, %v1015
        %v1469 = vsel %vm1456, %v1436, %v1017
        %v1470 = vsel %vm1456, %v1437, %v1019
        %v1471 = vsel %vm1456, %v1438, %v1021
        %v1472 = vsel %vm1456, %v1439, %v1023
        %v1473 = vsel %vm1456, %v1440, %v1025
        %v1474 = vsel %vm1456, %v1441, %v1027
        %v1475 = vsel %vm1456, %v1442, %v1029
        %v1476 = vsel %vm1456, %v1443, %v1031
        %v1477 = vsel %vm1456, %v1444, %v1033
        %v1478 = vsel %vm1456, %v1445, %v1035
        %v1479 = vsel %vm1456, %v1446, %v1037
        %v1480 = vsel %vm1456, %v1447, %v1039
        %v1481 = vsel %vm1456, %v1448, %v1041
        %v1482 = vsel %vm1456, %v1449, %v1043
        %v1483 = vsel %vm1456, %v1450, %v1045
        %v1484 = vsel %vm1456, %v1451, %v1047
        %v1485 = vsel %vm1456, %v1452, %v1049
        %v1486 = vsel %vm1456, %v1453, %v1051
        %v1487 = vsel %vm1456, %v1454, %v1053
        %v1488 = vsel %vm1456, %v1455, %v1055
        %vm1489 = vcmask 228352
        %v1490 = vsel %vm1489, %v1457, %v1095
        %v1491 = vsel %vm1489, %v1458, %v1097
        %v1492 = vsel %vm1489, %v1459, %v1099
        %v1493 = vsel %vm1489, %v1460, %v1101
        %v1494 = vsel %vm1489, %v1461, %v1103
        %v1495 = vsel %vm1489, %v1462, %v1105
        %v1496 = vsel %vm1489, %v1463, %v1107
        %v1497 = vsel %vm1489, %v1464, %v1109
        %v1498 = vsel %vm1489, %v1465, %v1111
        %v1499 = vsel %vm1489, %v1466, %v1113
        %v1500 = vsel %vm1489, %v1467, %v1115
        %v1501 = vsel %vm1489, %v1468, %v1117
        %v1502 = vsel %vm1489, %v1469, %v1119
        %v1503 = vsel %vm1489, %v1470, %v1121
        %v1504 = vsel %vm1489, %v1471, %v1123
        %v1505 = vsel %vm1489, %v1472, %v1125
        %v1506 = vsel %vm1489, %v1473, %v1127
        %v1507 = vsel %vm1489, %v1474, %v1129
        %v1508 = vsel %vm1489, %v1475, %v1131
        %v1509 = vsel %vm1489, %v1476, %v1133
        %v1510 = vsel %vm1489, %v1477, %v1135
        %v1511 = vsel %vm1489, %v1478, %v1137
        %v1512 = vsel %vm1489, %v1479, %v1139
        %v1513 = vsel %vm1489, %v1480, %v1141
        %v1514 = vsel %vm1489, %v1481, %v1143
        %v1515 = vsel %vm1489, %v1482, %v1145
        %v1516 = vsel %vm1489, %v1483, %v1147
        %v1517 = vsel %vm1489, %v1484, %v1149
        %v1518 = vsel %vm1489, %v1485, %v1151
        %v1519 = vsel %vm1489, %v1486, %v1153
        %v1520 = vsel %vm1489, %v1487, %v1155
        %v1521 = vsel %vm1489, %v1488, %v1157
        %vm1522 = vcmask 261120
        %v1523 = vsel %vm1522, %v1490, %v1196
        %v1524 = vsel %vm1522, %v1491, %v1198
        %v1525 = vsel %vm1522, %v1492, %v1200
        %v1526 = vsel %vm1522, %v1493, %v1202
        %v1527 = vsel %vm1522, %v1494, %v1204
        %v1528 = vsel %vm1522, %v1495, %v1206
        %v1529 = vsel %vm1522, %v1496, %v1208
        %v1530 = vsel %vm1522, %v1497, %v1210
        %v1531 = vsel %vm1522, %v1498, %v1212
        %v1532 = vsel %vm1522, %v1499, %v1214
        %v1533 = vsel %vm1522, %v1500, %v1216
        %v1534 = vsel %vm1522, %v1501, %v1218
        %v1535 = vsel %vm1522, %v1502, %v1220
        %v1536 = vsel %vm1522, %v1503, %v1222
        %v1537 = vsel %vm1522, %v1504, %v1224
        %v1538 = vsel %vm1522, %v1505, %v1226
        %v1539 = vsel %vm1522, %v1506, %v1228
        %v1540 = vsel %vm1522, %v1507, %v1230
        %v1541 = vsel %vm1522, %v1508, %v1232
        %v1542 = vsel %vm1522, %v1509, %v1234
        %v1543 = vsel %vm1522, %v1510, %v1236
        %v1544 = vsel %vm1522, %v1511, %v1238
        %v1545 = vsel %vm1522, %v1512, %v1240
        %v1546 = vsel %vm1522, %v1513, %v1242
        %v1547 = vsel %vm1522, %v1514, %v1244
        %v1548 = vsel %vm1522, %v1515, %v1246
        %v1549 = vsel %vm1522, %v1516, %v1248
        %v1550 = vsel %vm1522, %v1517, %v1250
        %v1551 = vsel %vm1522, %v1518, %v1252
        %v1552 = vsel %vm1522, %v1519, %v1254
        %v1553 = vsel %vm1522, %v1520, %v1256
        %v1554 = vsel %vm1522, %v1521, %v1258
        %v1555 = vpack.c.bf16 %v1524, %v1523
        %v1556 = vpack.c.bf16 %v1526, %v1525
        %v1557 = vpack.c.bf16 %v1528, %v1527
        %v1558 = vpack.c.bf16 %v1530, %v1529
        %v1559 = vpack.c.bf16 %v1532, %v1531
        %v1560 = vpack.c.bf16 %v1534, %v1533
        %v1561 = vpack.c.bf16 %v1536, %v1535
        %v1562 = vpack.c.bf16 %v1538, %v1537
        %v1563 = vpack.c.bf16 %v1540, %v1539
        %v1564 = vpack.c.bf16 %v1542, %v1541
        %v1565 = vpack.c.bf16 %v1544, %v1543
        %v1566 = vpack.c.bf16 %v1546, %v1545
        %v1567 = vpack.c.bf16 %v1548, %v1547
        %v1568 = vpack.c.bf16 %v1550, %v1549
        %v1569 = vpack.c.bf16 %v1552, %v1551
        %v1570 = vpack.c.bf16 %v1554, %v1553
        %v1571 = vld [vmem:[#allocation2] sm:$0xf]
        %v1572 = vld [vmem:[#allocation2 + $0x4] sm:$0xf]
        %v1573 = vld [vmem:[#allocation2 + $0x8] sm:$0xf]
        %v1574 = vld [vmem:[#allocation2 + $0xc] sm:$0xf]
        %v1575 = vld [vmem:[#allocation2 + $0x10] sm:$0x3]
        %v1581 = vunpack.c.l.b16 %v1571
        %v1582 = vunpack.c.l.b16 %v1572
        %v1583 = vunpack.c.l.b16 %v1573
        %v1584 = vunpack.c.l.b16 %v1574
        %v1585 = vunpack.c.l.b16 %v1575
        %v1586 = vpack.c.b16 %v1582, %v1581
        %v1587 = vpack.c.b16 %v1584, %v1583
        %v1588 = vpack.c.b16 %v1585, %v1585
        %vm1591 = vcmask 293888
        %v1593 = vsel %vm1591, %v1555, 0
        %v1596 = vsel %vm1591, %v1556, 0
        %v1599 = vsel %vm1591, %v1557, 0
        %v1602 = vsel %vm1591, %v1558, 0
        %v1605 = vsel %vm1591, %v1559, 0
        %v1608 = vsel %vm1591, %v1560, 0
        %v1611 = vsel %vm1591, %v1561, 0
        %v1614 = vsel %vm1591, %v1562, 0
        %v1617 = vsel %vm1591, %v1563, 0
        %v1620 = vsel %vm1591, %v1564, 0
        %v1623 = vsel %vm1591, %v1565, 0
        %v1626 = vsel %vm1591, %v1566, 0
        %v1629 = vsel %vm1591, %v1567, 0
        %v1632 = vsel %vm1591, %v1568, 0
        %v1635 = vsel %vm1591, %v1569, 0
        %v1638 = vsel %vm1591, %v1570, 0
        %vm1640 = vcmask 1041408
        %v1642 = vsel %vm1640, %v1588, 0
        %1644 = vmatprep.subr.bf16.mxu0 0
        %1645 = vmatpush1.bf16.msra.mxu0 %v1586
        %1646 = vmatprep.subr.bf16.mxu0 0
        %1647 = vmatpush1.bf16.msra.mxu0 %v1587
        %1648 = vmatprep.subr.bf16.mxu0 0
        %1649 = vmatpush1.bf16.msra.mxu0 %v1642
        %1650 = vmatprep.subr.bf16.mxu0 0
        %1651 = vmatpush1.bf16.msra.mxu0 0
        %1652 = vmatprep.subr.bf16.mxu0 0
        %1653 = vmatpush1.bf16.msra.mxu0 0
        %1654 = vmatprep.subr.bf16.mxu0 0
        %1655 = vmatpush1.bf16.msra.mxu0 0
        %1656 = vmatprep.subr.bf16.mxu0 0
        %1657 = vmatpush1.bf16.msra.mxu0 0
        %1658 = vmatprep.subr.bf16.mxu0 0
        %1659 = vmatpush1.bf16.msra.mxu0 0
        %1660 = vmatprep.subr.bf16.mxu0 0
        %1661 = vmatpush1.bf16.msra.mxu0 0
        %1662 = vmatprep.subr.bf16.mxu0 0
        %1663 = vmatpush1.bf16.msra.mxu0 0
        %1664 = vmatprep.subr.bf16.mxu0 0
        %1665 = vmatpush1.bf16.msra.mxu0 0
        %1666 = vmatprep.subr.bf16.mxu0 0
        %1667 = vmatpush1.bf16.msra.mxu0 0
        %1668 = vmatprep.subr.bf16.mxu0 0
        %1669 = vmatpush1.bf16.msra.mxu0 0
        %1670 = vmatprep.subr.bf16.mxu0 0
        %1671 = vmatpush1.bf16.msra.mxu0 0
        %1672 = vmatprep.subr.bf16.mxu0 0
        %1673 = vmatpush1.bf16.msra.mxu0 0
        %1674 = vmatprep.subr.bf16.mxu0 0
        %1675 = vmatpush1.bf16.msra.mxu0 0
        %1676 = vmatprep.mubr.bf16.mxu0 0
        %1677 = vmatmul.mubr.bf16.gmra.mrb[0].mxu0 %v1593
        %v1678 = vpop.f32.mrb[0].mxu0
        %v1679 = vadd.f32 0.0, %v1678
        %v1680 = vpop.f32.mrb[0].mxu0
        %v1681 = vpop.f32.mrb[0].mxu0
        %v1682 = vadd.f32 0.0, %v1681
        %v1683 = vpop.f32.mrb[0].mxu0
        %1684 = vmatprep.mubr.bf16.mxu0 0
        %1685 = vmatmul.mubr.bf16.gmra.mrb[0].mxu0 %v1596
        %v1686 = vpop.f32.mrb[0].mxu0
        %v1687 = vadd.f32 0.0, %v1686
        %v1688 = vpop.f32.mrb[0].mxu0
        %v1689 = vpop.f32.mrb[0].mxu0
        %v1690 = vadd.f32 0.0, %v1689
        %v1691 = vpop.f32.mrb[0].mxu0
        %1692 = vmatprep.mubr.bf16.mxu0 0
        %1693 = vmatmul.mubr.bf16.gmra.mrb[0].mxu0 %v1599
        %v1694 = vpop.f32.mrb[0].mxu0
        %v1695 = vadd.f32 0.0, %v1694
        %v1696 = vpop.f32.mrb[0].mxu0
        %v1697 = vpop.f32.mrb[0].mxu0
        %v1698 = vadd.f32 0.0, %v1697
        %v1699 = vpop.f32.mrb[0].mxu0
        %1700 = vmatprep.mubr.bf16.mxu0 0
        %1701 = vmatmul.mubr.bf16.gmra.mrb[0].mxu0 %v1602
        %v1702 = vpop.f32.mrb[0].mxu0
        %v1703 = vadd.f32 0.0, %v1702
        %v1704 = vpop.f32.mrb[0].mxu0
        %v1705 = vpop.f32.mrb[0].mxu0
        %v1706 = vadd.f32 0.0, %v1705
        %v1707 = vpop.f32.mrb[0].mxu0
        %1708 = vmatprep.mubr.bf16.mxu0 0
        %1709 = vmatmul.mubr.bf16.gmra.mrb[0].mxu0 %v1605
        %v1710 = vpop.f32.mrb[0].mxu0
        %v1711 = vadd.f32 0.0, %v1710
        %v1712 = vpop.f32.mrb[0].mxu0
        %v1713 = vpop.f32.mrb[0].mxu0
        %v1714 = vadd.f32 0.0, %v1713
        %v1715 = vpop.f32.mrb[0].mxu0
        %1716 = vmatprep.mubr.bf16.mxu0 0
        %1717 = vmatmul.mubr.bf16.gmra.mrb[0].mxu0 %v1608
        %v1718 = vpop.f32.mrb[0].mxu0
        %v1719 = vadd.f32 0.0, %v1718
        %v1720 = vpop.f32.mrb[0].mxu0
        %v1721 = vpop.f32.mrb[0].mxu0
        %v1722 = vadd.f32 0.0, %v1721
        %v1723 = vpop.f32.mrb[0].mxu0
        %1724 = vmatprep.mubr.bf16.mxu0 0
        %1725 = vmatmul.mubr.bf16.gmra.mrb[0].mxu0 %v1611
        %v1726 = vpop.f32.mrb[0].mxu0
        %v1727 = vadd.f32 0.0, %v1726
        %v1728 = vpop.f32.mrb[0].mxu0
        %v1729 = vpop.f32.mrb[0].mxu0
        %v1730 = vadd.f32 0.0, %v1729
        %v1731 = vpop.f32.mrb[0].mxu0
        %1732 = vmatprep.mubr.bf16.mxu0 0
        %1733 = vmatmul.mubr.bf16.gmra.mrb[0].mxu0 %v1614
        %v1734 = vpop.f32.mrb[0].mxu0
        %v1735 = vadd.f32 0.0, %v1734
        %v1736 = vpop.f32.mrb[0].mxu0
        %v1737 = vpop.f32.mrb[0].mxu0
        %v1738 = vadd.f32 0.0, %v1737
        %v1739 = vpop.f32.mrb[0].mxu0
        %1740 = vmatprep.mubr.bf16.mxu0 0
        %1741 = vmatmul.mubr.bf16.gmra.mrb[0].mxu0 %v1617
        %v1742 = vpop.f32.mrb[0].mxu0
        %v1743 = vadd.f32 0.0, %v1742
        %v1744 = vpop.f32.mrb[0].mxu0
        %v1745 = vpop.f32.mrb[0].mxu0
        %v1746 = vadd.f32 0.0, %v1745
        %v1747 = vpop.f32.mrb[0].mxu0
        %1748 = vmatprep.mubr.bf16.mxu0 0
        %1749 = vmatmul.mubr.bf16.gmra.mrb[0].mxu0 %v1620
        %v1750 = vpop.f32.mrb[0].mxu0
        %v1751 = vadd.f32 0.0, %v1750
        %v1752 = vpop.f32.mrb[0].mxu0
        %v1753 = vpop.f32.mrb[0].mxu0
        %v1754 = vadd.f32 0.0, %v1753
        %v1755 = vpop.f32.mrb[0].mxu0
        %1756 = vmatprep.mubr.bf16.mxu0 0
        %1757 = vmatmul.mubr.bf16.gmra.mrb[0].mxu0 %v1623
        %v1758 = vpop.f32.mrb[0].mxu0
        %v1759 = vadd.f32 0.0, %v1758
        %v1760 = vpop.f32.mrb[0].mxu0
        %v1761 = vpop.f32.mrb[0].mxu0
        %v1762 = vadd.f32 0.0, %v1761
        %v1763 = vpop.f32.mrb[0].mxu0
        %1764 = vmatprep.mubr.bf16.mxu0 0
        %1765 = vmatmul.mubr.bf16.gmra.mrb[0].mxu0 %v1626
        %v1766 = vpop.f32.mrb[0].mxu0
        %v1767 = vadd.f32 0.0, %v1766
        %v1768 = vpop.f32.mrb[0].mxu0
        %v1769 = vpop.f32.mrb[0].mxu0
        %v1770 = vadd.f32 0.0, %v1769
        %v1771 = vpop.f32.mrb[0].mxu0
        %1772 = vmatprep.mubr.bf16.mxu0 0
        %1773 = vmatmul.mubr.bf16.gmra.mrb[0].mxu0 %v1629
        %v1774 = vpop.f32.mrb[0].mxu0
        %v1775 = vadd.f32 0.0, %v1774
        %v1776 = vpop.f32.mrb[0].mxu0
        %v1777 = vpop.f32.mrb[0].mxu0
        %v1778 = vadd.f32 0.0, %v1777
        %v1779 = vpop.f32.mrb[0].mxu0
        %1780 = vmatprep.mubr.bf16.mxu0 0
        %1781 = vmatmul.mubr.bf16.gmra.mrb[0].mxu0 %v1632
        %v1782 = vpop.f32.mrb[0].mxu0
        %v1783 = vadd.f32 0.0, %v1782
        %v1784 = vpop.f32.mrb[0].mxu0
        %v1785 = vpop.f32.mrb[0].mxu0
        %v1786 = vadd.f32 0.0, %v1785
        %v1787 = vpop.f32.mrb[0].mxu0
        %1788 = vmatprep.mubr.bf16.mxu0 0
        %1789 = vmatmul.mubr.bf16.gmra.mrb[0].mxu0 %v1635
        %v1790 = vpop.f32.mrb[0].mxu0
        %v1791 = vadd.f32 0.0, %v1790
        %v1792 = vpop.f32.mrb[0].mxu0
        %v1793 = vpop.f32.mrb[0].mxu0
        %v1794 = vadd.f32 0.0, %v1793
        %v1795 = vpop.f32.mrb[0].mxu0
        %1796 = vmatprep.mubr.bf16.mxu0 0
        %1797 = vmatmul.mubr.bf16.gmra.mrb[0].mxu0 %v1638
        %v1798 = vpop.f32.mrb[0].mxu0
        %v1799 = vadd.f32 0.0, %v1798
        %v1800 = vpop.f32.mrb[0].mxu0
        %v1801 = vpop.f32.mrb[0].mxu0
        %v1802 = vadd.f32 0.0, %v1801
        %v1803 = vpop.f32.mrb[0].mxu0
        %1804 = vdwg.mxu0
        %v1805 = vld [vmem:[#allocation5] sm:$0x1]
        %v1807 = vlaneseq
        %v1808 = vshrl.u32 %v1807, 7
        %v1809 = vsub.s32 0, %v1808
        %v1810 = vrot.slane %v1805, %v1809
        %v1812 = vmul.f32 %v1679, %v1810
        %v1813 = vmul.f32 %v1682, %v1810
        %v1814 = vmul.f32 %v1687, %v1810
        %v1815 = vmul.f32 %v1690, %v1810
        %v1816 = vmul.f32 %v1695, %v1810
        %v1817 = vmul.f32 %v1698, %v1810
        %v1818 = vmul.f32 %v1703, %v1810
        %v1819 = vmul.f32 %v1706, %v1810
        %v1820 = vmul.f32 %v1711, %v1810
        %v1821 = vmul.f32 %v1714, %v1810
        %v1822 = vmul.f32 %v1719, %v1810
        %v1823 = vmul.f32 %v1722, %v1810
        %v1824 = vmul.f32 %v1727, %v1810
        %v1825 = vmul.f32 %v1730, %v1810
        %v1826 = vmul.f32 %v1735, %v1810
        %v1827 = vmul.f32 %v1738, %v1810
        %v1828 = vmul.f32 %v1743, %v1810
        %v1829 = vmul.f32 %v1746, %v1810
        %v1830 = vmul.f32 %v1751, %v1810
        %v1831 = vmul.f32 %v1754, %v1810
        %v1832 = vmul.f32 %v1759, %v1810
        %v1833 = vmul.f32 %v1762, %v1810
        %v1834 = vmul.f32 %v1767, %v1810
        %v1835 = vmul.f32 %v1770, %v1810
        %v1836 = vmul.f32 %v1775, %v1810
        %v1837 = vmul.f32 %v1778, %v1810
        %v1838 = vmul.f32 %v1783, %v1810
        %v1839 = vmul.f32 %v1786, %v1810
        %v1840 = vmul.f32 %v1791, %v1810
        %v1841 = vmul.f32 %v1794, %v1810
        %v1842 = vmul.f32 %v1799, %v1810
        %v1843 = vmul.f32 %v1802, %v1810
        %1844 = vst [vmem:[%s227] sm:$0xff] %v1812
        %1845 = vst [vmem:[%s227 + $0x8] sm:$0xff] %v1813
        %1846 = vst [vmem:[%s227 + $0x10] sm:$0xff] %v1814
        %1847 = vst [vmem:[%s227 + $0x18] sm:$0xff] %v1815
        %1848 = vst [vmem:[%s227 + $0x20] sm:$0xff] %v1816
        %1849 = vst [vmem:[%s227 + $0x28] sm:$0xff] %v1817
        %1850 = vst [vmem:[%s227 + $0x30] sm:$0xff] %v1818
        %1851 = vst [vmem:[%s227 + $0x38] sm:$0xff] %v1819
        %1852 = vst [vmem:[%s227 + $0x40] sm:$0xff] %v1820
        %1853 = vst [vmem:[%s227 + $0x48] sm:$0xff] %v1821
        %1854 = vst [vmem:[%s227 + $0x50] sm:$0xff] %v1822
        %1855 = vst [vmem:[%s227 + $0x58] sm:$0xff] %v1823
        %1856 = vst [vmem:[%s227 + $0x60] sm:$0xff] %v1824
        %1857 = vst [vmem:[%s227 + $0x68] sm:$0xff] %v1825
        %1858 = vst [vmem:[%s227 + $0x70] sm:$0xff] %v1826
        %1859 = vst [vmem:[%s227 + $0x78] sm:$0xff] %v1827
        %1860 = vst [vmem:[%s227 + $0x80] sm:$0xff] %v1828
        %1861 = vst [vmem:[%s227 + $0x88] sm:$0xff] %v1829
        %1862 = vst [vmem:[%s227 + $0x90] sm:$0xff] %v1830
        %1863 = vst [vmem:[%s227 + $0x98] sm:$0xff] %v1831
        %1864 = vst [vmem:[%s227 + $0xa0] sm:$0xff] %v1832
        %1865 = vst [vmem:[%s227 + $0xa8] sm:$0xff] %v1833
        %1866 = vst [vmem:[%s227 + $0xb0] sm:$0xff] %v1834
        %1867 = vst [vmem:[%s227 + $0xb8] sm:$0xff] %v1835
        %1868 = vst [vmem:[%s227 + $0xc0] sm:$0xff] %v1836
        %1869 = vst [vmem:[%s227 + $0xc8] sm:$0xff] %v1837
        %1870 = vst [vmem:[%s227 + $0xd0] sm:$0xff] %v1838
        %1871 = vst [vmem:[%s227 + $0xd8] sm:$0xff] %v1839
        %1872 = vst [vmem:[%s227 + $0xe0] sm:$0xff] %v1840
        %1873 = vst [vmem:[%s227 + $0xe8] sm:$0xff] %v1841
        %1874 = vst [vmem:[%s227 + $0xf0] sm:$0xff] %v1842
        %1875 = vst [vmem:[%s227 + $0xf8] sm:$0xff] %v1843
        %s1876 = sand.u32 %s109, 1
        %s1877 = scalar_lea.sflag [#allocation4], %s1876
        %s1878 = sand.u32 %s109, 1
        %s1879 = smul.addr %s1878, 256
        %s1880 = scalar_lea.vmem [#allocation8], %s1879
        // Predicated region
        $region45: #{tpu_custom_call.1} parent=31 // pred_check
          %p1881 = pneg %p119
        $region46: #{tpu_custom_call.1} parent=31 // pred_check_branch
          %1883 = sbr.rel (%p1881) target = $region48
        $region47: #{tpu_custom_call.1} parent=31 // pred_region
          %s1884 = smul.u32 32, %s24
          %s1886 = ssub.s32 4096, 4096
          %1887 = vsyncadd %s1877, %s1886
          %s1888 = smul.addr %s23, 32
          %s1889 = sadd.s32 %s1884, %s1888
          %s1890 = smul.addr %s1889, 128
          %s1891 = scalar_lea.hbm %s3, %s1890
          %s1892 = sshll.u32 %s1880, 4
          %s1893 = int_to_ptr.vmem [resolvable:$true] %s1892
          %1898 = dma.vmem_to_hbm [thread:$0]  %s1893, 4096, %s1891, %s1877, 128, 128, 8
        $region48: #{tpu_custom_call.1} parent=31 // pred_fallthru
          _
      $region32: #{tpu_custom_call.1} parent=5 // pred_fallthru
        _
      %p1899 = scmp.le.s32.totalorder 2, %s14
      // Predicated region
      $region49: #{tpu_custom_call.1} parent=5 // pred_check
        %p1900 = pneg %p1899
      $region50: #{tpu_custom_call.1} parent=5 // pred_check_branch
        %1902 = sbr.rel (%p1900) target = $region52
      $region51: #{tpu_custom_call.1} parent=5 // pred_region
        %s1903 = ssub.s32 %s14, 2
        // Predicated region
        $region53: #{tpu_custom_call.1} parent=51 // pred_check
          %p1904 = pneg %p125
        $region54: #{tpu_custom_call.1} parent=51 // pred_check_branch
          %1906 = sbr.rel (%p1904) target = $region56
        $region55: #{tpu_custom_call.1} parent=51 // pred_region
          %s1907 = sand.u32 %s110, 1
          %s1908 = scalar_lea.sflag [#allocation4], %s1907
          %s1909 = sand.u32 %s110, 1
          %s1910 = smul.addr %s1909, 256
          %s1911 = scalar_lea.vmem [#allocation8], %s1910
          %1912 = dma.done %s1908, 4096
        $region56: #{tpu_custom_call.1} parent=51 // pred_fallthru
          _
      $region52: #{tpu_custom_call.1} parent=5 // pred_fallthru
        _
    $region6: #{tpu_custom_call.1} parent=1 // loop_footer
      %s18 = sadd.s32 1, %s14
    $region7: #{tpu_custom_call.1} parent=1 // loop_footer_branch
      %13 = sbr.rel target = $region3
    $region8: #{tpu_custom_call.1} parent=1 // loop_exit
      _
    %1913 = vsyncpa [#allocation3], 1
    %s1914 = scalar_lea.sflag [#allocation3], 1
    %1915 = vsyncpa %s1914, 1
    %1916 = vsyncpa [#allocation6], 1
    %1917 = vsyncpa [#allocation4], 1
    %s1918 = scalar_lea.sflag [#allocation4], 1
    %1919 = vsyncpa %s1918, 1

</llo_original>
